<compile_context>
chip_gen: v7x
topology: tpu7x:2x2x1
jax: 0.10.0
libtpu: 0.0.40
codegen_flags: <defaults>
</compile_context>

<pallas_src>
import jax
import jax.numpy as jnp
import numpy as np
from jax.experimental import pallas as pl
from jax.experimental.pallas import tpu as pltpu

LN_EPS = 1e-12
MASK_NEG = 1e30
SPAN_WINDOW = 15  # tril(triu(ones, 0), 15)


def _layer_norm(v, g, beta):
    """BertLayerNorm (eps inside the sqrt), single-pass stats + EUP rsqrt."""
    u = jnp.mean(v, axis=-1, keepdims=True)
    var = jnp.maximum(jnp.mean(v * v, axis=-1, keepdims=True) - u * u, 0.0)
    return g * ((v - u) * jax.lax.rsqrt(var + LN_EPS)) + beta


def _span_kernel(x_ref, mrow_ref, mcol_ref,
                 w1_ref, b1_ref, g_ref, beta_ref,
                 w2s_ref, b2s_ref, w2e_ref, b2e_ref,
                 start_ref, end_ref, rowmax_ref, colmax_ref):
    S = x_ref.shape[1]
    H2 = w2s_ref.shape[1]                      # 2 * hidden

    x = x_ref[0]                               # [S, H]  bf16
    # Context-mask penalties (torch: logits - 1e30 * (1 - context_mask)),
    # computed once per layout and reused for both heads.
    pen_row = MASK_NEG * (1.0 - mrow_ref[0])   # [1, S]  f32
    pen_col = MASK_NEG * (1.0 - mcol_ref[0])   # [S, 1]  f32

    # Stacked (start | end) first linear: one bf16 MXU pass, f32 accumulate.
    h = jnp.dot(x, w1_ref[...], preferred_element_type=jnp.float32)   # [S, 4H]
    h = jnp.maximum(h + b1_ref[...], 0.0)

    g = g_ref[...]
    beta = beta_ref[...]
    hs = _layer_norm(h[:, :H2], g[:, :H2], beta[:, :H2])               # [S, 2H]
    he = _layer_norm(h[:, H2:], g[:, H2:], beta[:, H2:])               # [S, 2H]

    w2s = w2s_ref[...]                         # [1, 2H]
    w2e = w2e_ref[...]

    # Final 2H->1 projections, produced in both layouts (no transpose op):
    #  * lane-dense rows [1, S] via an M=1 MXU contraction (these are the logits
    #    written out -> full-width stores, and the lane-oriented operand of the
    #    banded outer sums),
    #  * columns [S, 1] via a VPU multiply + lane reduce (the sublane-oriented
    #    operand of the banded outer sums).
    start_row = jnp.einsum('ok,sk->os', w2s, hs,
                           preferred_element_type=jnp.float32) + b2s_ref[...]
    end_row = jnp.einsum('ok,sk->os', w2e, he,
                         preferred_element_type=jnp.float32) + b2e_ref[...]
    start_col = jnp.sum(hs * w2s, axis=-1, keepdims=True) + b2s_ref[...]
    end_col = jnp.sum(he * w2e, axis=-1, keepdims=True) + b2e_ref[...]

    start_row = start_row - pen_row
    end_row = end_row - pen_row
    start_col = start_col - pen_col
    end_col = end_col - pen_col

    start_ref[0] = start_row                   # [1, S]  lane-dense
    end_ref[0] = end_row                       # [1, S]

    # Fused banded outer max. Band mask generated on the fly from iotas:
    # valid iff 0 <= end_idx - start_idx <= 15.
    r = jax.lax.broadcasted_iota(jnp.int32, (S, S), 0)   # sublane index
    c = jax.lax.broadcasted_iota(jnp.int32, (S, S), 1)   # lane index
    neg = jnp.float32(-MASK_NEG)

    # m1[j, i] = outer[i, j]   (sublane = end idx j, lane = start idx i)
    m1 = end_col + start_row + jnp.where(
        (r >= c) & (r - c <= SPAN_WINDOW), 0.0, neg)
    # m2[i, j] = outer[i, j]   (sublane = start idx i, lane = end idx j)
    m2 = start_col + end_row + jnp.where(
        (c >= r) & (c - r <= SPAN_WINDOW), 0.0, neg)

    rowmax_ref[0] = jnp.max(m1, axis=0, keepdims=True)   # torch outer.max(dim=2)[0]
    colmax_ref[0] = jnp.max(m2, axis=0, keepdims=True)   # torch outer.max(dim=1)[0]


def _type_kernel(x0_ref, w1_ref, b1_ref, g_ref, beta_ref, w2_ref, b2_ref, out_ref):
    # Type head for all B token-0 rows at once (non-gridded).
    h = jnp.dot(x0_ref[...], w1_ref[...], preferred_element_type=jnp.float32)
    h = jnp.maximum(h + b1_ref[...], 0.0)
    h = _layer_norm(h, g_ref[...], beta_ref[...])
    out_ref[...] = jnp.dot(h, w2_ref[...],
                           preferred_element_type=jnp.float32) + b2_ref[...]


def init_params(key, hidden):
    H, H2 = hidden, 2 * hidden
    keys = jax.random.split(key, 9)

    def head(k1, k2, k3, num_answer):
        return dict(
            w1=jax.random.normal(k1, (H, H2), jnp.float32) * 0.05,
            b1=jax.random.normal(k2, (1, H2), jnp.float32) * 0.05,
            g=jnp.ones((1, H2), jnp.float32),
            beta=jnp.zeros((1, H2), jnp.float32),
            w2=jax.random.normal(k3, (H2, num_answer), jnp.float32) * 0.05,
            b2=jnp.zeros((1, num_answer), jnp.float32),
        )

    return dict(
        start=head(keys[0], keys[1], keys[2], 1),
        end=head(keys[3], keys[4], keys[5], 1),
        type=head(keys[6], keys[7], keys[8], 3),
    )


def prediction_layer_forward(params, context_input, context_mask, return_yp=True):
    B, S, H = context_input.shape
    x = context_input.astype(jnp.bfloat16)               # bf16 activations for the MXU
    mask = context_mask.astype(jnp.float32)
    mask_row = mask[:, None, :]                          # [B, 1, S]
    mask_col = mask[:, :, None]                          # [B, S, 1]

    ps, pe, pt = params['start'], params['end'], params['type']
    # Stack start|end first-layer params along the output dim; bf16 weights.
    w1se = jnp.concatenate([ps['w1'], pe['w1']], axis=1).astype(jnp.bfloat16)  # [H, 4H]
    b1se = jnp.concatenate([ps['b1'], pe['b1']], axis=1)                       # [1, 4H]
    gse = jnp.concatenate([ps['g'], pe['g']], axis=1)
    betase = jnp.concatenate([ps['beta'], pe['beta']], axis=1)
    w2s = ps['w2'].T                                      # [1, 2H]
    w2e = pe['w2'].T
    b2s, b2e = ps['b2'], pe['b2']                         # [1, 1]

    def rep(a):  # whole-array block, constant index map -> no re-DMA across steps
        nd = a.ndim
        return pl.BlockSpec(a.shape, lambda b, _n=nd: (0,) * _n)

    in_specs = [
        pl.BlockSpec((1, S, H), lambda b: (b, 0, 0)),     # x
        pl.BlockSpec((1, 1, S), lambda b: (b, 0, 0)),     # mask (row layout)
        pl.BlockSpec((1, S, 1), lambda b: (b, 0, 0)),     # mask (col layout)
        rep(w1se), rep(b1se), rep(gse), rep(betase),
        rep(w2s), rep(b2s), rep(w2e), rep(b2e),
    ]
    out_specs = tuple(pl.BlockSpec((1, 1, S), lambda b: (b, 0, 0)) for _ in range(4))

    start3, end3, rowmax3, colmax3 = pl.pallas_call(
        _span_kernel,
        out_shape=(
            jax.ShapeDtypeStruct((B, 1, S), jnp.float32),
            jax.ShapeDtypeStruct((B, 1, S), jnp.float32),
            jax.ShapeDtypeStruct((B, 1, S), jnp.float32),
            jax.ShapeDtypeStruct((B, 1, S), jnp.float32),
        ),
        grid_spec=pltpu.PrefetchScalarGridSpec(
            num_scalar_prefetch=0,
            grid=(B,),
            in_specs=in_specs,
            out_specs=out_specs,
        ),
        compiler_params=pltpu.CompilerParams(
            dimension_semantics=("parallel",),
            vmem_limit_bytes=48 * 1024 * 1024,
        ),
    )(x, mask_row, mask_col, w1se, b1se, gse, betase, w2s, b2s, w2e, b2e)

    # Type head (token 0 only) for all batch rows at once, out of the hot grid.
    x0 = x[:, 0, :]                                       # [B, H] bf16
    type_pred = pl.pallas_call(
        _type_kernel,
        out_shape=jax.ShapeDtypeStruct((B, pt['w2'].shape[1]), jnp.float32),
    )(x0, pt['w1'].astype(jnp.bfloat16), pt['b1'], pt['g'], pt['beta'],
      pt['w2'], pt['b2'])

    start_pred = start3[:, 0, :]                          # [B, S]
    end_pred = end3[:, 0, :]

    if not return_yp:
        return start_pred, end_pred, type_pred

    # Final length-S argmax is trivial glue; the S x S masked max is in-kernel.
    yp1 = jnp.argmax(rowmax3[:, 0, :], axis=1)
    yp2 = jnp.argmax(colmax3[:, 0, :], axis=1)
    # TODO(synk): packing_mask path not implemented (example passes packing_mask=None).
    return start_pred, end_pred, type_pred, yp1, yp2


def reference_forward(params, context_input, context_mask):
    """Pure-JAX reference. Mirrors the kernel's bf16 cast on the first matmul;
    everything else (ReLU, two-pass BertLayerNorm, masking) in f32."""
    def head(p, x):
        h = jnp.dot(x.astype(jnp.bfloat16), p['w1'].astype(jnp.bfloat16),
                    preferred_element_type=jnp.float32) + p['b1']
        h = jnp.maximum(h, 0.0)
        u = jnp.mean(h, axis=-1, keepdims=True)
        s = jnp.mean((h - u) ** 2, axis=-1, keepdims=True)
        h = (h - u) / jnp.sqrt(s + LN_EPS)
        h = p['g'] * h + p['beta']
        return jnp.dot(h, p['w2'], preferred_element_type=jnp.float32) + p['b2']

    cm = context_mask.astype(jnp.float32)
    start = head(params['start'], context_input)[..., 0] - MASK_NEG * (1.0 - cm)
    end = head(params['end'], context_input)[..., 0] - MASK_NEG * (1.0 - cm)
    typ = head(params['type'], context_input[:, 0, :])
    S = context_input.shape[1]
    ii = jnp.arange(S)[:, None]
    jj = jnp.arange(S)[None, :]
    omask = ((jj >= ii) & (jj - ii <= SPAN_WINDOW)).astype(jnp.float32)
    outer = start[:, :, None] + end[:, None, :] - MASK_NEG * (1.0 - omask[None])
    yp1 = jnp.argmax(jnp.max(outer, axis=2), axis=1)
    yp2 = jnp.argmax(jnp.max(outer, axis=1), axis=1)
    return start, end, typ, yp1, yp2


if __name__ == "__main__":
    key = jax.random.PRNGKey(0)
    B, S, H = 2, 16, 32
    k_in, k_par = jax.random.split(key)

    params = init_params(k_par, H)
    context_input = jax.random.normal(k_in, (B, S, H), jnp.float32)
    lengths = jnp.array([S, 10])
    context_mask = (jnp.arange(S)[None, :] < lengths[:, None]).astype(jnp.float32)

    out = prediction_layer_forward(params, context_input, context_mask, return_yp=True)
    out = jax.block_until_ready(out)
    start_p, end_p, type_p, yp1, yp2 = out

    ref = reference_forward(params, context_input, context_mask)
    np.testing.assert_allclose(np.asarray(start_p), np.asarray(ref[0]), rtol=1e-2, atol=1e-3)
    np.testing.assert_allclose(np.asarray(end_p), np.asarray(ref[1]), rtol=1e-2, atol=1e-3)
    np.testing.assert_allclose(np.asarray(type_p), np.asarray(ref[2]), rtol=1e-2, atol=1e-3)
    assert np.array_equal(np.asarray(yp1), np.asarray(ref[3]))
    assert np.array_equal(np.asarray(yp2), np.asarray(ref[4]))

    print("KERNEL_OK")
</pallas_src>

<mosaic_0001>
module attributes {stable_mosaic.version = 11 : i64} {
  func.func @_span_kernel(%arg0: i32, %arg1: memref<1x16x32xbf16, #tpu.memory_space<vmem>>, %arg2: memref<1x1x16xf32, #tpu.memory_space<vmem>>, %arg3: memref<1x16x1xf32, #tpu.memory_space<vmem>>, %arg4: memref<32x128xbf16, #tpu.memory_space<vmem>>, %arg5: memref<1x128xf32, #tpu.memory_space<vmem>>, %arg6: memref<1x128xf32, #tpu.memory_space<vmem>>, %arg7: memref<1x128xf32, #tpu.memory_space<vmem>>, %arg8: memref<1x64xf32, #tpu.memory_space<vmem>>, %arg9: memref<1x1xf32, #tpu.memory_space<vmem>>, %arg10: memref<1x64xf32, #tpu.memory_space<vmem>>, %arg11: memref<1x1xf32, #tpu.memory_space<vmem>>, %arg12: memref<1x1x16xf32, #tpu.memory_space<vmem>>, %arg13: memref<1x1x16xf32, #tpu.memory_space<vmem>>, %arg14: memref<1x1x16xf32, #tpu.memory_space<vmem>>, %arg15: memref<1x1x16xf32, #tpu.memory_space<vmem>>) attributes {dimension_semantics = [#tpu.dimension_semantics<parallel>], iteration_bounds = array<i64: 2>, scalar_prefetch = 0 : i64, scratch_operands = 0 : i64, tpu.core_type = #tpu.core_type<tc>, window_params = [{transform_indices = @transform_0, window_bounds = array<i64: 1, 16, 32>}, {transform_indices = @transform_1, window_bounds = array<i64: 1, 1, 16>}, {transform_indices = @transform_2, window_bounds = array<i64: 1, 16, 1>}, {pipeline_mode = #tpu.pipeline_mode<synchronous>, transform_indices = @transform_3, window_bounds = array<i64: 32, 128>}, {pipeline_mode = #tpu.pipeline_mode<synchronous>, transform_indices = @transform_4, window_bounds = array<i64: 1, 128>}, {pipeline_mode = #tpu.pipeline_mode<synchronous>, transform_indices = @transform_5, window_bounds = array<i64: 1, 128>}, {pipeline_mode = #tpu.pipeline_mode<synchronous>, transform_indices = @transform_6, window_bounds = array<i64: 1, 128>}, {pipeline_mode = #tpu.pipeline_mode<synchronous>, transform_indices = @transform_7, window_bounds = array<i64: 1, 64>}, {pipeline_mode = #tpu.pipeline_mode<synchronous>, transform_indices = @transform_8, window_bounds = array<i64: 1, 1>}, {pipeline_mode = #tpu.pipeline_mode<synchronous>, transform_indices = @transform_9, window_bounds = array<i64: 1, 64>}, {pipeline_mode = #tpu.pipeline_mode<synchronous>, transform_indices = @transform_10, window_bounds = array<i64: 1, 1>}, {transform_indices = @transform_11, window_bounds = array<i64: 1, 1, 16>}, {transform_indices = @transform_12, window_bounds = array<i64: 1, 1, 16>}, {transform_indices = @transform_13, window_bounds = array<i64: 1, 1, 16>}, {transform_indices = @transform_14, window_bounds = array<i64: 1, 1, 16>}]} {
    %c0 = arith.constant 0 : index
    %c0_0 = arith.constant 0 : index
    %c0_1 = arith.constant 0 : index
    %0 = vector.load %arg1[%c0, %c0_0, %c0_1] : memref<1x16x32xbf16, #tpu.memory_space<vmem>>, vector<1x16x32xbf16>
    %1 = vector.shape_cast %0 : vector<1x16x32xbf16> to vector<16x32xbf16>
    %c0_2 = arith.constant 0 : index
    %c0_3 = arith.constant 0 : index
    %c0_4 = arith.constant 0 : index
    %2 = vector.load %arg2[%c0_2, %c0_3, %c0_4] : memref<1x1x16xf32, #tpu.memory_space<vmem>>, vector<1x1x16xf32>
    %3 = vector.shape_cast %2 : vector<1x1x16xf32> to vector<1x16xf32>
    %cst = arith.constant 1.000000e+00 : f32
    %4 = vector.broadcast %cst : f32 to vector<1x16xf32>
    %5 = arith.subf %4, %3 : vector<1x16xf32>
    %cst_5 = arith.constant 1.000000e+30 : f32
    %6 = vector.broadcast %cst_5 : f32 to vector<1x16xf32>
    %7 = arith.mulf %6, %5 : vector<1x16xf32>
    %c0_6 = arith.constant 0 : index
    %c0_7 = arith.constant 0 : index
    %c0_8 = arith.constant 0 : index
    %8 = vector.load %arg3[%c0_6, %c0_7, %c0_8] : memref<1x16x1xf32, #tpu.memory_space<vmem>>, vector<1x16x1xf32>
    %9 = vector.shape_cast %8 : vector<1x16x1xf32> to vector<16x1xf32>
    %cst_9 = arith.constant 1.000000e+00 : f32
    %10 = vector.broadcast %cst_9 : f32 to vector<16x1xf32>
    %11 = arith.subf %10, %9 : vector<16x1xf32>
    %cst_10 = arith.constant 1.000000e+30 : f32
    %12 = vector.broadcast %cst_10 : f32 to vector<16x1xf32>
    %13 = arith.mulf %12, %11 : vector<16x1xf32>
    %c0_11 = arith.constant 0 : index
    %c0_12 = arith.constant 0 : index
    %14 = vector.load %arg4[%c0_11, %c0_12] : memref<32x128xbf16, #tpu.memory_space<vmem>>, vector<32x128xbf16>
    %cst_13 = arith.constant dense<0.000000e+00> : vector<16x128xf32>
    %15 = tpu.matmul %1, %14, %cst_13 {dimension_numbers = #tpu.dot_dimension_numbers<[1], [0], [0], [1], [0, 0, 1, 1], [], []>} : vector<16x32xbf16>, vector<32x128xbf16>, vector<16x128xf32> -> vector<16x128xf32>
    %c0_14 = arith.constant 0 : index
    %c0_15 = arith.constant 0 : index
    %16 = vector.load %arg5[%c0_14, %c0_15] : memref<1x128xf32, #tpu.memory_space<vmem>>, vector<1x128xf32>
    %17 = vector.broadcast %16 : vector<1x128xf32> to vector<16x128xf32>
    %18 = arith.addf %15, %17 : vector<16x128xf32>
    %cst_16 = arith.constant 0.000000e+00 : f32
    %19 = vector.broadcast %cst_16 : f32 to vector<16x128xf32>
    %20 = arith.maximumf %18, %19 : vector<16x128xf32>
    %c0_17 = arith.constant 0 : index
    %c0_18 = arith.constant 0 : index
    %21 = vector.load %arg6[%c0_17, %c0_18] : memref<1x128xf32, #tpu.memory_space<vmem>>, vector<1x128xf32>
    %c0_19 = arith.constant 0 : index
    %c0_20 = arith.constant 0 : index
    %22 = vector.load %arg7[%c0_19, %c0_20] : memref<1x128xf32, #tpu.memory_space<vmem>>, vector<1x128xf32>
    %23 = vector.extract_strided_slice %20 {offsets = [0, 0], sizes = [16, 64], strides = [1, 1]} : vector<16x128xf32> to vector<16x64xf32>
    %24 = vector.extract_strided_slice %21 {offsets = [0, 0], sizes = [1, 64], strides = [1, 1]} : vector<1x128xf32> to vector<1x64xf32>
    %25 = vector.extract_strided_slice %22 {offsets = [0, 0], sizes = [1, 64], strides = [1, 1]} : vector<1x128xf32> to vector<1x64xf32>
    %cst_21 = arith.constant dense<0.000000e+00> : vector<16xf32>
    %26 = vector.multi_reduction <add>, %23, %cst_21 [1] : vector<16x64xf32> to vector<16xf32>
    %27 = vector.shape_cast %26 : vector<16xf32> to vector<16x1xf32>
    %cst_22 = arith.constant 6.400000e+01 : f32
    %28 = vector.broadcast %cst_22 : f32 to vector<16x1xf32>
    %29 = arith.divf %27, %28 : vector<16x1xf32>
    %30 = arith.mulf %23, %23 : vector<16x64xf32>
    %cst_23 = arith.constant dense<0.000000e+00> : vector<16xf32>
    %31 = vector.multi_reduction <add>, %30, %cst_23 [1] : vector<16x64xf32> to vector<16xf32>
    %32 = vector.shape_cast %31 : vector<16xf32> to vector<16x1xf32>
    %cst_24 = arith.constant 6.400000e+01 : f32
    %33 = vector.broadcast %cst_24 : f32 to vector<16x1xf32>
    %34 = arith.divf %32, %33 : vector<16x1xf32>
    %35 = arith.mulf %29, %29 : vector<16x1xf32>
    %36 = arith.subf %34, %35 : vector<16x1xf32>
    %cst_25 = arith.constant 0.000000e+00 : f32
    %37 = vector.broadcast %cst_25 : f32 to vector<16x1xf32>
    %38 = arith.maximumf %36, %37 : vector<16x1xf32>
    %39 = vector.broadcast %29 : vector<16x1xf32> to vector<16x64xf32>
    %40 = arith.subf %23, %39 : vector<16x64xf32>
    %cst_26 = arith.constant 9.99999996E-13 : f32
    %41 = vector.broadcast %cst_26 : f32 to vector<16x1xf32>
    %42 = arith.addf %38, %41 : vector<16x1xf32>
    %43 = math.rsqrt %42 : vector<16x1xf32>
    %44 = vector.broadcast %43 : vector<16x1xf32> to vector<16x64xf32>
    %45 = arith.mulf %40, %44 : vector<16x64xf32>
    %46 = vector.broadcast %24 : vector<1x64xf32> to vector<16x64xf32>
    %47 = arith.mulf %46, %45 : vector<16x64xf32>
    %48 = vector.broadcast %25 : vector<1x64xf32> to vector<16x64xf32>
    %49 = arith.addf %47, %48 : vector<16x64xf32>
    %50 = vector.extract_strided_slice %20 {offsets = [0, 64], sizes = [16, 64], strides = [1, 1]} : vector<16x128xf32> to vector<16x64xf32>
    %51 = vector.extract_strided_slice %21 {offsets = [0, 64], sizes = [1, 64], strides = [1, 1]} : vector<1x128xf32> to vector<1x64xf32>
    %52 = vector.extract_strided_slice %22 {offsets = [0, 64], sizes = [1, 64], strides = [1, 1]} : vector<1x128xf32> to vector<1x64xf32>
    %cst_27 = arith.constant dense<0.000000e+00> : vector<16xf32>
    %53 = vector.multi_reduction <add>, %50, %cst_27 [1] : vector<16x64xf32> to vector<16xf32>
    %54 = vector.shape_cast %53 : vector<16xf32> to vector<16x1xf32>
    %cst_28 = arith.constant 6.400000e+01 : f32
    %55 = vector.broadcast %cst_28 : f32 to vector<16x1xf32>
    %56 = arith.divf %54, %55 : vector<16x1xf32>
    %57 = arith.mulf %50, %50 : vector<16x64xf32>
    %cst_29 = arith.constant dense<0.000000e+00> : vector<16xf32>
    %58 = vector.multi_reduction <add>, %57, %cst_29 [1] : vector<16x64xf32> to vector<16xf32>
    %59 = vector.shape_cast %58 : vector<16xf32> to vector<16x1xf32>
    %cst_30 = arith.constant 6.400000e+01 : f32
    %60 = vector.broadcast %cst_30 : f32 to vector<16x1xf32>
    %61 = arith.divf %59, %60 : vector<16x1xf32>
    %62 = arith.mulf %56, %56 : vector<16x1xf32>
    %63 = arith.subf %61, %62 : vector<16x1xf32>
    %cst_31 = arith.constant 0.000000e+00 : f32
    %64 = vector.broadcast %cst_31 : f32 to vector<16x1xf32>
    %65 = arith.maximumf %63, %64 : vector<16x1xf32>
    %66 = vector.broadcast %56 : vector<16x1xf32> to vector<16x64xf32>
    %67 = arith.subf %50, %66 : vector<16x64xf32>
    %cst_32 = arith.constant 9.99999996E-13 : f32
    %68 = vector.broadcast %cst_32 : f32 to vector<16x1xf32>
    %69 = arith.addf %65, %68 : vector<16x1xf32>
    %70 = math.rsqrt %69 : vector<16x1xf32>
    %71 = vector.broadcast %70 : vector<16x1xf32> to vector<16x64xf32>
    %72 = arith.mulf %67, %71 : vector<16x64xf32>
    %73 = vector.broadcast %51 : vector<1x64xf32> to vector<16x64xf32>
    %74 = arith.mulf %73, %72 : vector<16x64xf32>
    %75 = vector.broadcast %52 : vector<1x64xf32> to vector<16x64xf32>
    %76 = arith.addf %74, %75 : vector<16x64xf32>
    %c0_33 = arith.constant 0 : index
    %c0_34 = arith.constant 0 : index
    %77 = vector.load %arg8[%c0_33, %c0_34] : memref<1x64xf32, #tpu.memory_space<vmem>>, vector<1x64xf32>
    %c0_35 = arith.constant 0 : index
    %c0_36 = arith.constant 0 : index
    %78 = vector.load %arg10[%c0_35, %c0_36] : memref<1x64xf32, #tpu.memory_space<vmem>>, vector<1x64xf32>
    "tpu.trace_start"() <{level = 10 : i32, message = "ok,sk->os"}> : () -> ()
    %cst_37 = arith.constant dense<0.000000e+00> : vector<1x16xf32>
    %79 = tpu.matmul %77, %49, %cst_37 {dimension_numbers = #tpu.dot_dimension_numbers<[1], [1], [0], [0], [0, 0, 1, 0], [], []>} : vector<1x64xf32>, vector<16x64xf32>, vector<1x16xf32> -> vector<1x16xf32>
    "tpu.trace_stop"() : () -> ()
    %c0_38 = arith.constant 0 : index
    %c0_39 = arith.constant 0 : index
    %80 = vector.load %arg9[%c0_38, %c0_39] : memref<1x1xf32, #tpu.memory_space<vmem>>, vector<1x1xf32>
    %81 = vector.broadcast %80 : vector<1x1xf32> to vector<1x16xf32>
    %82 = arith.addf %79, %81 : vector<1x16xf32>
    "tpu.trace_start"() <{level = 10 : i32, message = "ok,sk->os"}> : () -> ()
    %cst_40 = arith.constant dense<0.000000e+00> : vector<1x16xf32>
    %83 = tpu.matmul %78, %76, %cst_40 {dimension_numbers = #tpu.dot_dimension_numbers<[1], [1], [0], [0], [0, 0, 1, 0], [], []>} : vector<1x64xf32>, vector<16x64xf32>, vector<1x16xf32> -> vector<1x16xf32>
    "tpu.trace_stop"() : () -> ()
    %c0_41 = arith.constant 0 : index
    %c0_42 = arith.constant 0 : index
    %84 = vector.load %arg11[%c0_41, %c0_42] : memref<1x1xf32, #tpu.memory_space<vmem>>, vector<1x1xf32>
    %85 = vector.broadcast %84 : vector<1x1xf32> to vector<1x16xf32>
    %86 = arith.addf %83, %85 : vector<1x16xf32>
    %87 = vector.broadcast %77 : vector<1x64xf32> to vector<16x64xf32>
    %88 = arith.mulf %49, %87 : vector<16x64xf32>
    %cst_43 = arith.constant dense<0.000000e+00> : vector<16xf32>
    %89 = vector.multi_reduction <add>, %88, %cst_43 [1] : vector<16x64xf32> to vector<16xf32>
    %90 = vector.shape_cast %89 : vector<16xf32> to vector<16x1xf32>
    %c0_44 = arith.constant 0 : index
    %c0_45 = arith.constant 0 : index
    %91 = vector.load %arg9[%c0_44, %c0_45] : memref<1x1xf32, #tpu.memory_space<vmem>>, vector<1x1xf32>
    %92 = vector.broadcast %91 : vector<1x1xf32> to vector<16x1xf32>
    %93 = arith.addf %90, %92 : vector<16x1xf32>
    %94 = vector.broadcast %78 : vector<1x64xf32> to vector<16x64xf32>
    %95 = arith.mulf %76, %94 : vector<16x64xf32>
    %cst_46 = arith.constant dense<0.000000e+00> : vector<16xf32>
    %96 = vector.multi_reduction <add>, %95, %cst_46 [1] : vector<16x64xf32> to vector<16xf32>
    %97 = vector.shape_cast %96 : vector<16xf32> to vector<16x1xf32>
    %c0_47 = arith.constant 0 : index
    %c0_48 = arith.constant 0 : index
    %98 = vector.load %arg11[%c0_47, %c0_48] : memref<1x1xf32, #tpu.memory_space<vmem>>, vector<1x1xf32>
    %99 = vector.broadcast %98 : vector<1x1xf32> to vector<16x1xf32>
    %100 = arith.addf %97, %99 : vector<16x1xf32>
    %101 = arith.subf %82, %7 : vector<1x16xf32>
    %102 = arith.subf %86, %7 : vector<1x16xf32>
    %103 = arith.subf %93, %13 : vector<16x1xf32>
    %104 = arith.subf %100, %13 : vector<16x1xf32>
    %c0_49 = arith.constant 0 : index
    %c0_50 = arith.constant 0 : index
    %c0_51 = arith.constant 0 : index
    %105 = vector.load %arg12[%c0_49, %c0_50, %c0_51] : memref<1x1x16xf32, #tpu.memory_space<vmem>>, vector<1x1x16xf32>
    %106 = vector.shape_cast %105 : vector<1x1x16xf32> to vector<1x16xf32>
    %107 = vector.shape_cast %101 : vector<1x16xf32> to vector<1x1x16xf32>
    tpu.vector_store %arg12[%c0_49, %c0_50, %c0_51], %107 {strides = array<i32>} : memref<1x1x16xf32, #tpu.memory_space<vmem>>, vector<1x1x16xf32>,
    %c0_52 = arith.constant 0 : index
    %c0_53 = arith.constant 0 : index
    %c0_54 = arith.constant 0 : index
    %108 = vector.load %arg13[%c0_52, %c0_53, %c0_54] : memref<1x1x16xf32, #tpu.memory_space<vmem>>, vector<1x1x16xf32>
    %109 = vector.shape_cast %108 : vector<1x1x16xf32> to vector<1x16xf32>
    %110 = vector.shape_cast %102 : vector<1x16xf32> to vector<1x1x16xf32>
    tpu.vector_store %arg13[%c0_52, %c0_53, %c0_54], %110 {strides = array<i32>} : memref<1x1x16xf32, #tpu.memory_space<vmem>>, vector<1x1x16xf32>,
    %111 = tpu.iota {dimensions = array<i32: 0>} : vector<16x16xi32>
    %112 = tpu.iota {dimensions = array<i32: 1>} : vector<16x16xi32>
    %113 = vector.broadcast %104 : vector<16x1xf32> to vector<16x16xf32>
    %114 = vector.broadcast %101 : vector<1x16xf32> to vector<16x16xf32>
    %115 = arith.addf %113, %114 : vector<16x16xf32>
    %116 = arith.cmpi sge, %111, %112 : vector<16x16xi32>
    %117 = arith.subi %111, %112 : vector<16x16xi32>
    %c15_i32 = arith.constant 15 : i32
    %118 = vector.broadcast %c15_i32 : i32 to vector<16x16xi32>
    %119 = arith.cmpi sle, %117, %118 : vector<16x16xi32>
    %120 = arith.andi %116, %119 : vector<16x16xi1>
    %cst_55 = arith.constant 0.000000e+00 : f32
    %cst_56 = arith.constant -1.000000e+30 : f32
    %121 = vector.broadcast %cst_55 : f32 to vector<16x16xf32>
    %122 = vector.broadcast %cst_56 : f32 to vector<16x16xf32>
    %123 = arith.select %120, %121, %122 : vector<16x16xi1>, vector<16x16xf32>
    %124 = arith.addf %115, %123 : vector<16x16xf32>
    %125 = vector.broadcast %103 : vector<16x1xf32> to vector<16x16xf32>
    %126 = vector.broadcast %102 : vector<1x16xf32> to vector<16x16xf32>
    %127 = arith.addf %125, %126 : vector<16x16xf32>
    %128 = arith.cmpi sge, %112, %111 : vector<16x16xi32>
    %129 = arith.subi %112, %111 : vector<16x16xi32>
    %c15_i32_57 = arith.constant 15 : i32
    %130 = vector.broadcast %c15_i32_57 : i32 to vector<16x16xi32>
    %131 = arith.cmpi sle, %129, %130 : vector<16x16xi32>
    %132 = arith.andi %128, %131 : vector<16x16xi1>
    %cst_58 = arith.constant 0.000000e+00 : f32
    %cst_59 = arith.constant -1.000000e+30 : f32
    %133 = vector.broadcast %cst_58 : f32 to vector<16x16xf32>
    %134 = vector.broadcast %cst_59 : f32 to vector<16x16xf32>
    %135 = arith.select %132, %133, %134 : vector<16x16xi1>, vector<16x16xf32>
    %136 = arith.addf %127, %135 : vector<16x16xf32>
    %cst_60 = arith.constant dense<0xFF800000> : vector<16xf32>
    %137 = vector.multi_reduction <maximumf>, %124, %cst_60 [0] : vector<16x16xf32> to vector<16xf32>
    %138 = vector.shape_cast %137 : vector<16xf32> to vector<1x16xf32>
    %c0_61 = arith.constant 0 : index
    %c0_62 = arith.constant 0 : index
    %c0_63 = arith.constant 0 : index
    %139 = vector.load %arg14[%c0_61, %c0_62, %c0_63] : memref<1x1x16xf32, #tpu.memory_space<vmem>>, vector<1x1x16xf32>
    %140 = vector.shape_cast %139 : vector<1x1x16xf32> to vector<1x16xf32>
    %141 = vector.shape_cast %138 : vector<1x16xf32> to vector<1x1x16xf32>
    tpu.vector_store %arg14[%c0_61, %c0_62, %c0_63], %141 {strides = array<i32>} : memref<1x1x16xf32, #tpu.memory_space<vmem>>, vector<1x1x16xf32>,
    %cst_64 = arith.constant dense<0xFF800000> : vector<16xf32>
    %142 = vector.multi_reduction <maximumf>, %136, %cst_64 [0] : vector<16x16xf32> to vector<16xf32>
    %143 = vector.shape_cast %142 : vector<16xf32> to vector<1x16xf32>
    %c0_65 = arith.constant 0 : index
    %c0_66 = arith.constant 0 : index
    %c0_67 = arith.constant 0 : index
    %144 = vector.load %arg15[%c0_65, %c0_66, %c0_67] : memref<1x1x16xf32, #tpu.memory_space<vmem>>, vector<1x1x16xf32>
    %145 = vector.shape_cast %144 : vector<1x1x16xf32> to vector<1x16xf32>
    %146 = vector.shape_cast %143 : vector<1x16xf32> to vector<1x1x16xf32>
    tpu.vector_store %arg15[%c0_65, %c0_66, %c0_67], %146 {strides = array<i32>} : memref<1x1x16xf32, #tpu.memory_space<vmem>>, vector<1x1x16xf32>,
    return
  }
  func.func @transform_0(%arg0: i32) -> (i32, i32, i32) {
    %c0_i32 = arith.constant 0 : i32
    %c0_i32_0 = arith.constant 0 : i32
    %c0_i32_1 = arith.constant 0 : i32
    return %arg0, %c0_i32, %c0_i32_0 : i32, i32, i32
  }
  func.func @transform_1(%arg0: i32) -> (i32, i32, i32) {
    %c0_i32 = arith.constant 0 : i32
    %c0_i32_0 = arith.constant 0 : i32
    %c0_i32_1 = arith.constant 0 : i32
    return %arg0, %c0_i32, %c0_i32_0 : i32, i32, i32
  }
  func.func @transform_2(%arg0: i32) -> (i32, i32, i32) {
    %c0_i32 = arith.constant 0 : i32
    %c0_i32_0 = arith.constant 0 : i32
    %c0_i32_1 = arith.constant 0 : i32
    return %arg0, %c0_i32, %c0_i32_0 : i32, i32, i32
  }
  func.func @transform_3(%arg0: i32) -> (i32, i32) {
    %c0_i32 = arith.constant 0 : i32
    %c0_i32_0 = arith.constant 0 : i32
    %c0_i32_1 = arith.constant 0 : i32
    return %c0_i32, %c0_i32_0 : i32, i32
  }
  func.func @transform_4(%arg0: i32) -> (i32, i32) {
    %c0_i32 = arith.constant 0 : i32
    %c0_i32_0 = arith.constant 0 : i32
    %c0_i32_1 = arith.constant 0 : i32
    return %c0_i32, %c0_i32_0 : i32, i32
  }
  func.func @transform_5(%arg0: i32) -> (i32, i32) {
    %c0_i32 = arith.constant 0 : i32
    %c0_i32_0 = arith.constant 0 : i32
    %c0_i32_1 = arith.constant 0 : i32
    return %c0_i32, %c0_i32_0 : i32, i32
  }
  func.func @transform_6(%arg0: i32) -> (i32, i32) {
    %c0_i32 = arith.constant 0 : i32
    %c0_i32_0 = arith.constant 0 : i32
    %c0_i32_1 = arith.constant 0 : i32
    return %c0_i32, %c0_i32_0 : i32, i32
  }
  func.func @transform_7(%arg0: i32) -> (i32, i32) {
    %c0_i32 = arith.constant 0 : i32
    %c0_i32_0 = arith.constant 0 : i32
    %c0_i32_1 = arith.constant 0 : i32
    return %c0_i32, %c0_i32_0 : i32, i32
  }
  func.func @transform_8(%arg0: i32) -> (i32, i32) {
    %c0_i32 = arith.constant 0 : i32
    %c0_i32_0 = arith.constant 0 : i32
    %c0_i32_1 = arith.constant 0 : i32
    return %c0_i32, %c0_i32_0 : i32, i32
  }
  func.func @transform_9(%arg0: i32) -> (i32, i32) {
    %c0_i32 = arith.constant 0 : i32
    %c0_i32_0 = arith.constant 0 : i32
    %c0_i32_1 = arith.constant 0 : i32
    return %c0_i32, %c0_i32_0 : i32, i32
  }
  func.func @transform_10(%arg0: i32) -> (i32, i32) {
    %c0_i32 = arith.constant 0 : i32
    %c0_i32_0 = arith.constant 0 : i32
    %c0_i32_1 = arith.constant 0 : i32
    return %c0_i32, %c0_i32_0 : i32, i32
  }
  func.func @transform_11(%arg0: i32) -> (i32, i32, i32) {
    %c0_i32 = arith.constant 0 : i32
    %c0_i32_0 = arith.constant 0 : i32
    %c0_i32_1 = arith.constant 0 : i32
    return %arg0, %c0_i32, %c0_i32_0 : i32, i32, i32
  }
  func.func @transform_12(%arg0: i32) -> (i32, i32, i32) {
    %c0_i32 = arith.constant 0 : i32
    %c0_i32_0 = arith.constant 0 : i32
    %c0_i32_1 = arith.constant 0 : i32
    return %arg0, %c0_i32, %c0_i32_0 : i32, i32, i32
  }
  func.func @transform_13(%arg0: i32) -> (i32, i32, i32) {
    %c0_i32 = arith.constant 0 : i32
    %c0_i32_0 = arith.constant 0 : i32
    %c0_i32_1 = arith.constant 0 : i32
    return %arg0, %c0_i32, %c0_i32_0 : i32, i32, i32
  }
  func.func @transform_14(%arg0: i32) -> (i32, i32, i32) {
    %c0_i32 = arith.constant 0 : i32
    %c0_i32_0 = arith.constant 0 : i32
    %c0_i32_1 = arith.constant 0 : i32
    return %arg0, %c0_i32, %c0_i32_0 : i32, i32, i32
  }
}

</mosaic_0001>

<llo_original>
// kernel: tpu_custom_call.1
$region0: #{tpu_custom_call.1}
  #allocation0 [shape = 'u32[]', space=smem, size = 0x4, offset = 0x4, fixed_abs, tag = 'smem constant byte address 0x4 - core index']
  #allocation1 [shape = 'u32[144,128]{1,0:T(1,128)}', space=vmem, size = 0x12000, scoped, tag = 'internal scratch']
  #allocation2 [shape = 'f32[1,1]{1,0:T(1,128)S(1)}', space=vmem, size = 0x200, scoped, tag = 'scoped memory for tpu_custom_call.1']
  #allocation3 [shape = 'f32[1,1]{1,0:T(1,128)S(1)}', space=vmem, size = 0x200, scoped, tag = 'scoped memory for tpu_custom_call.1']
  %s0 = inlined_call_operand.vmem [shape: bf16[2,16,32], index: 0, kind: input, shape index: {}]
  %s1 = inlined_call_operand.vmem [shape: f32[2,1,16], index: 1, kind: input, shape index: {}]
  %s2 = inlined_call_operand.vmem [shape: f32[2,16,1], index: 2, kind: input, shape index: {}]
  %s3 = inlined_call_operand.vmem [shape: bf16[32,128], index: 3, kind: input, shape index: {}]
  %s4 = inlined_call_operand.vmem [shape: f32[1,128], index: 4, kind: input, shape index: {}]
  %s5 = inlined_call_operand.vmem [shape: f32[1,128], index: 5, kind: input, shape index: {}]
  %s6 = inlined_call_operand.vmem [shape: f32[1,128], index: 6, kind: input, shape index: {}]
  %s7 = inlined_call_operand.vmem [shape: f32[1,64], index: 7, kind: input, shape index: {}]
  %s8 = inlined_call_operand.<no memory space> [shape: f32[1,1], index: 8, kind: input, shape index: {}]
  %s9 = inlined_call_operand.vmem [shape: f32[1,64], index: 9, kind: input, shape index: {}]
  %s10 = inlined_call_operand.<no memory space> [shape: f32[1,1], index: 10, kind: input, shape index: {}]
  %s11 = inlined_call_operand.hbm [shape: f32[2,1,16], index: 11, kind: output, shape index: {0}]
  %s12 = inlined_call_operand.hbm [shape: f32[2,1,16], index: 12, kind: output, shape index: {1}]
  %s13 = inlined_call_operand.hbm [shape: f32[2,1,16], index: 13, kind: output, shape index: {2}]
  %s14 = inlined_call_operand.hbm [shape: f32[2,1,16], index: 14, kind: output, shape index: {3}]
  %15 = xla_tuple %s11, %s12, %s13, %s14
  %s16 = sld [smem:[#allocation0]]
  $region101: #{tpu_custom_call.1} parent=0
    _
  %s18 = ssub.s32 1, %s16
  %s19 = scalar_select 0, %s18, %s16
  %v20 = vstv %s8
  %21 = vst [vmem:[#allocation2] sm:$0x1] %v20
  %v22 = vstv %s10
  %23 = vst [vmem:[#allocation3] sm:$0x1] %v22
  $region1: #{tpu_custom_call.1} parent=0
    #allocation4 [shape = 'u8[1024]{0}', space=vmem, size = 0x400, scoped, tag = 'output window, operand 0']
    #allocation5 [shape = 's32[2]{0}', space=sflag, size = 0x8, scoped, tag = 'scoped memory for tpu_custom_call.1']
    #allocation6 [shape = 'u8[1024]{0}', space=vmem, size = 0x400, scoped, tag = 'output window, operand 1']
    #allocation7 [shape = 's32[2]{0}', space=sflag, size = 0x8, scoped, tag = 'scoped memory for tpu_custom_call.1']
    #allocation8 [shape = 'u8[1024]{0}', space=vmem, size = 0x400, scoped, tag = 'output window, operand 2']
    #allocation9 [shape = 'u8[1024]{0}', space=vmem, size = 0x400, scoped, tag = 'output window, operand 3']
    #allocation10 [shape = 's32[2]{0}', space=sflag, size = 0x8, scoped, tag = 'scoped memory for tpu_custom_call.1']
    %24 = vsyncpa [#allocation5], 0
    %s25 = scalar_lea.sflag [#allocation5], 1
    %26 = vsyncpa %s25, 0
    %27 = vsyncpa [#allocation7], 0
    %s28 = scalar_lea.sflag [#allocation7], 1
    %29 = vsyncpa %s28, 0
    %30 = vsyncpa [#allocation10], 0
    %s31 = scalar_lea.sflag [#allocation10], 1
    %32 = vsyncpa %s31, 0
    loop: start=0, step=1, limit=4
    $region2: #{tpu_custom_call.1} parent=1 // loop_pre_header
      _
    $region3: #{tpu_custom_call.1} parent=1 // loop_header
      %s34 = sphi 0, %s38
      %p35 = scmp.ge.s32.totalorder %s34, 4
      %s44 = sphi 0, %s46
      %s47 = sphi 0, %s44
      %s48 = sphi 0, %s47
      %s64 = sphi 0, %s48
      %s70 = sphi 0, %s72
      %s73 = sphi 0, %s70
      %s74 = sphi 0, %s73
      %s90 = sphi 0, %s74
      %s96 = sphi 0, %s98
      %s99 = sphi 0, %s96
      %s100 = sphi 0, %s99
      %s116 = sphi 0, %s100
      %s120 = sphi 0, %s120
      %s122 = sphi 0, %s120
      %s123 = sphi 0, %s122
      %s137 = sphi 0, %s123
      %s141 = sphi 0, %s141
      %s143 = sphi 0, %s141
      %s144 = sphi 0, %s143
      %s158 = sphi 0, %s144
      %s162 = sphi 0, %s162
      %s164 = sphi 0, %s162
      %s165 = sphi 0, %s164
      %s179 = sphi 0, %s165
      %s183 = sphi 0, %s183
      %s185 = sphi 0, %s183
      %s186 = sphi 0, %s185
      %s200 = sphi 0, %s186
      %s204 = sphi 0, %s204
      %s206 = sphi 0, %s204
      %s207 = sphi 0, %s206
      %s221 = sphi 0, %s207
      %s225 = sphi 0, %s225
      %s227 = sphi 0, %s225
      %s228 = sphi 0, %s227
      %s242 = sphi 0, %s228
      %s246 = sphi 0, %s246
      %s248 = sphi 0, %s246
      %s249 = sphi 0, %s248
      %s263 = sphi 0, %s249
      %s267 = sphi 0, %s267
      %s269 = sphi 0, %s267
      %s270 = sphi 0, %s269
      %s284 = sphi 0, %s270
      %s290 = sphi 0, %s292
      %s293 = sphi 0, %s290
      %s294 = sphi 0, %s293
      %s310 = sphi 0, %s294
      %s316 = sphi 0, %s318
      %s319 = sphi 0, %s316
      %s320 = sphi 0, %s319
      %s336 = sphi 0, %s320
      %s342 = sphi 0, %s344
      %s345 = sphi 0, %s342
      %s346 = sphi 0, %s345
      %s362 = sphi 0, %s346
      %s368 = sphi 0, %s370
      %s371 = sphi 0, %s368
      %s372 = sphi 0, %s371
      %s388 = sphi 0, %s372
    $region4: #{tpu_custom_call.1} parent=1 // loop_header_branch
      %37 = sbr.rel (%p35) target = $region8
    $region5: #{tpu_custom_call.1} parent=1 // loop_body
      %s39 = ssub.s32 %s34, 1
      %s40 = ssub.s32 %s34, 2
      %s41 = sadd.s32 %s34, 1
      %s42 = ssub.s32 %s34, %s41
      %p43 = scmp.eq.s32.totalorder %s42, 0
      %s45 = sadd.s32 %s44, 1
      %s46 = scalar_select %p43, %s44, %s45
      %p49 = pneg %p43
      %p50 = scmp.eq.s32.totalorder %s34, 1
      %p51 = por %p49, %p50
      %p52 = scmp.ne.s32.totalorder %s44, %s47
      %p53 = scmp.eq.s32.totalorder %s34, 0
      %p54 = por %p52, %p53
      %p55 = scmp.ne.s32.totalorder %s44, %s47
      %p56 = scmp.eq.s32.totalorder %s39, 1
      %p57 = por %p55, %p56
      %p58 = scmp.ne.s32.totalorder %s47, %s48
      %p59 = scmp.eq.s32.totalorder %s39, 0
      %p60 = por %p58, %p59
      %p61 = scmp.ne.s32.totalorder %s47, %s48
      %p62 = scmp.eq.s32.totalorder %s40, 1
      %p63 = por %p61, %p62
      %p65 = scmp.ne.s32.totalorder %s48, %s64
      %p66 = scmp.eq.s32.totalorder %s40, 0
      %p67 = por %p65, %p66
      %s68 = ssub.s32 %s34, %s41
      %p69 = scmp.eq.s32.totalorder %s68, 0
      %s71 = sadd.s32 %s70, 1
      %s72 = scalar_select %p69, %s70, %s71
      %p75 = pneg %p69
      %p76 = scmp.eq.s32.totalorder %s34, 1
      %p77 = por %p75, %p76
      %p78 = scmp.ne.s32.totalorder %s70, %s73
      %p79 = scmp.eq.s32.totalorder %s34, 0
      %p80 = por %p78, %p79
      %p81 = scmp.ne.s32.totalorder %s70, %s73
      %p82 = scmp.eq.s32.totalorder %s39, 1
      %p83 = por %p81, %p82
      %p84 = scmp.ne.s32.totalorder %s73, %s74
      %p85 = scmp.eq.s32.totalorder %s39, 0
      %p86 = por %p84, %p85
      %p87 = scmp.ne.s32.totalorder %s73, %s74
      %p88 = scmp.eq.s32.totalorder %s40, 1
      %p89 = por %p87, %p88
      %p91 = scmp.ne.s32.totalorder %s74, %s90
      %p92 = scmp.eq.s32.totalorder %s40, 0
      %p93 = por %p91, %p92
      %s94 = ssub.s32 %s34, %s41
      %p95 = scmp.eq.s32.totalorder %s94, 0
      %s97 = sadd.s32 %s96, 1
      %s98 = scalar_select %p95, %s96, %s97
      %p101 = pneg %p95
      %p102 = scmp.eq.s32.totalorder %s34, 1
      %p103 = por %p101, %p102
      %p104 = scmp.ne.s32.totalorder %s96, %s99
      %p105 = scmp.eq.s32.totalorder %s34, 0
      %p106 = por %p104, %p105
      %p107 = scmp.ne.s32.totalorder %s96, %s99
      %p108 = scmp.eq.s32.totalorder %s39, 1
      %p109 = por %p107, %p108
      %p110 = scmp.ne.s32.totalorder %s99, %s100
      %p111 = scmp.eq.s32.totalorder %s39, 0
      %p112 = por %p110, %p111
      %p113 = scmp.ne.s32.totalorder %s99, %s100
      %p114 = scmp.eq.s32.totalorder %s40, 1
      %p115 = por %p113, %p114
      %p117 = scmp.ne.s32.totalorder %s100, %s116
      %p118 = scmp.eq.s32.totalorder %s40, 0
      %p119 = por %p117, %p118
      %s121 = sadd.s32 %s120, 1
      %p124 = scmp.eq.s32.totalorder %s34, 1
      %p125 = scmp.ne.s32.totalorder %s120, %s122
      %p126 = scmp.eq.s32.totalorder %s34, 0
      %p127 = por %p125, %p126
      %p128 = scmp.ne.s32.totalorder %s120, %s122
      %p129 = scmp.eq.s32.totalorder %s39, 1
      %p130 = por %p128, %p129
      %p131 = scmp.ne.s32.totalorder %s122, %s123
      %p132 = scmp.eq.s32.totalorder %s39, 0
      %p133 = por %p131, %p132
      %p134 = scmp.ne.s32.totalorder %s122, %s123
      %p135 = scmp.eq.s32.totalorder %s40, 1
      %p136 = por %p134, %p135
      %p138 = scmp.ne.s32.totalorder %s123, %s137
      %p139 = scmp.eq.s32.totalorder %s40, 0
      %p140 = por %p138, %p139
      %s142 = sadd.s32 %s141, 1
      %p145 = scmp.eq.s32.totalorder %s34, 1
      %p146 = scmp.ne.s32.totalorder %s141, %s143
      %p147 = scmp.eq.s32.totalorder %s34, 0
      %p148 = por %p146, %p147
      %p149 = scmp.ne.s32.totalorder %s141, %s143
      %p150 = scmp.eq.s32.totalorder %s39, 1
      %p151 = por %p149, %p150
      %p152 = scmp.ne.s32.totalorder %s143, %s144
      %p153 = scmp.eq.s32.totalorder %s39, 0
      %p154 = por %p152, %p153
      %p155 = scmp.ne.s32.totalorder %s143, %s144
      %p156 = scmp.eq.s32.totalorder %s40, 1
      %p157 = por %p155, %p156
      %p159 = scmp.ne.s32.totalorder %s144, %s158
      %p160 = scmp.eq.s32.totalorder %s40, 0
      %p161 = por %p159, %p160
      %s163 = sadd.s32 %s162, 1
      %p166 = scmp.eq.s32.totalorder %s34, 1
      %p167 = scmp.ne.s32.totalorder %s162, %s164
      %p168 = scmp.eq.s32.totalorder %s34, 0
      %p169 = por %p167, %p168
      %p170 = scmp.ne.s32.totalorder %s162, %s164
      %p171 = scmp.eq.s32.totalorder %s39, 1
      %p172 = por %p170, %p171
      %p173 = scmp.ne.s32.totalorder %s164, %s165
      %p174 = scmp.eq.s32.totalorder %s39, 0
      %p175 = por %p173, %p174
      %p176 = scmp.ne.s32.totalorder %s164, %s165
      %p177 = scmp.eq.s32.totalorder %s40, 1
      %p178 = por %p176, %p177
      %p180 = scmp.ne.s32.totalorder %s165, %s179
      %p181 = scmp.eq.s32.totalorder %s40, 0
      %p182 = por %p180, %p181
      %s184 = sadd.s32 %s183, 1
      %p187 = scmp.eq.s32.totalorder %s34, 1
      %p188 = scmp.ne.s32.totalorder %s183, %s185
      %p189 = scmp.eq.s32.totalorder %s34, 0
      %p190 = por %p188, %p189
      %p191 = scmp.ne.s32.totalorder %s183, %s185
      %p192 = scmp.eq.s32.totalorder %s39, 1
      %p193 = por %p191, %p192
      %p194 = scmp.ne.s32.totalorder %s185, %s186
      %p195 = scmp.eq.s32.totalorder %s39, 0
      %p196 = por %p194, %p195
      %p197 = scmp.ne.s32.totalorder %s185, %s186
      %p198 = scmp.eq.s32.totalorder %s40, 1
      %p199 = por %p197, %p198
      %p201 = scmp.ne.s32.totalorder %s186, %s200
      %p202 = scmp.eq.s32.totalorder %s40, 0
      %p203 = por %p201, %p202
      %s205 = sadd.s32 %s204, 1
      %p208 = scmp.eq.s32.totalorder %s34, 1
      %p209 = scmp.ne.s32.totalorder %s204, %s206
      %p210 = scmp.eq.s32.totalorder %s34, 0
      %p211 = por %p209, %p210
      %p212 = scmp.ne.s32.totalorder %s204, %s206
      %p213 = scmp.eq.s32.totalorder %s39, 1
      %p214 = por %p212, %p213
      %p215 = scmp.ne.s32.totalorder %s206, %s207
      %p216 = scmp.eq.s32.totalorder %s39, 0
      %p217 = por %p215, %p216
      %p218 = scmp.ne.s32.totalorder %s206, %s207
      %p219 = scmp.eq.s32.totalorder %s40, 1
      %p220 = por %p218, %p219
      %p222 = scmp.ne.s32.totalorder %s207, %s221
      %p223 = scmp.eq.s32.totalorder %s40, 0
      %p224 = por %p222, %p223
      %s226 = sadd.s32 %s225, 1
      %p229 = scmp.eq.s32.totalorder %s34, 1
      %p230 = scmp.ne.s32.totalorder %s225, %s227
      %p231 = scmp.eq.s32.totalorder %s34, 0
      %p232 = por %p230, %p231
      %p233 = scmp.ne.s32.totalorder %s225, %s227
      %p234 = scmp.eq.s32.totalorder %s39, 1
      %p235 = por %p233, %p234
      %p236 = scmp.ne.s32.totalorder %s227, %s228
      %p237 = scmp.eq.s32.totalorder %s39, 0
      %p238 = por %p236, %p237
      %p239 = scmp.ne.s32.totalorder %s227, %s228
      %p240 = scmp.eq.s32.totalorder %s40, 1
      %p241 = por %p239, %p240
      %p243 = scmp.ne.s32.totalorder %s228, %s242
      %p244 = scmp.eq.s32.totalorder %s40, 0
      %p245 = por %p243, %p244
      %s247 = sadd.s32 %s246, 1
      %p250 = scmp.eq.s32.totalorder %s34, 1
      %p251 = scmp.ne.s32.totalorder %s246, %s248
      %p252 = scmp.eq.s32.totalorder %s34, 0
      %p253 = por %p251, %p252
      %p254 = scmp.ne.s32.totalorder %s246, %s248
      %p255 = scmp.eq.s32.totalorder %s39, 1
      %p256 = por %p254, %p255
      %p257 = scmp.ne.s32.totalorder %s248, %s249
      %p258 = scmp.eq.s32.totalorder %s39, 0
      %p259 = por %p257, %p258
      %p260 = scmp.ne.s32.totalorder %s248, %s249
      %p261 = scmp.eq.s32.totalorder %s40, 1
      %p262 = por %p260, %p261
      %p264 = scmp.ne.s32.totalorder %s249, %s263
      %p265 = scmp.eq.s32.totalorder %s40, 0
      %p266 = por %p264, %p265
      %s268 = sadd.s32 %s267, 1
      %p271 = scmp.eq.s32.totalorder %s34, 1
      %p272 = scmp.ne.s32.totalorder %s267, %s269
      %p273 = scmp.eq.s32.totalorder %s34, 0
      %p274 = por %p272, %p273
      %p275 = scmp.ne.s32.totalorder %s267, %s269
      %p276 = scmp.eq.s32.totalorder %s39, 1
      %p277 = por %p275, %p276
      %p278 = scmp.ne.s32.totalorder %s269, %s270
      %p279 = scmp.eq.s32.totalorder %s39, 0
      %p280 = por %p278, %p279
      %p281 = scmp.ne.s32.totalorder %s269, %s270
      %p282 = scmp.eq.s32.totalorder %s40, 1
      %p283 = por %p281, %p282
      %p285 = scmp.ne.s32.totalorder %s270, %s284
      %p286 = scmp.eq.s32.totalorder %s40, 0
      %p287 = por %p285, %p286
      %s288 = ssub.s32 %s34, %s41
      %p289 = scmp.eq.s32.totalorder %s288, 0
      %s291 = sadd.s32 %s290, 1
      %s292 = scalar_select %p289, %s290, %s291
      %p295 = pneg %p289
      %p296 = scmp.eq.s32.totalorder %s34, 1
      %p297 = por %p295, %p296
      %p298 = scmp.ne.s32.totalorder %s290, %s293
      %p299 = scmp.eq.s32.totalorder %s34, 0
      %p300 = por %p298, %p299
      %p301 = scmp.ne.s32.totalorder %s290, %s293
      %p302 = scmp.eq.s32.totalorder %s39, 1
      %p303 = por %p301, %p302
      %p304 = scmp.ne.s32.totalorder %s293, %s294
      %p305 = scmp.eq.s32.totalorder %s39, 0
      %p306 = por %p304, %p305
      %p307 = scmp.ne.s32.totalorder %s293, %s294
      %p308 = scmp.eq.s32.totalorder %s40, 1
      %p309 = por %p307, %p308
      %p311 = scmp.ne.s32.totalorder %s294, %s310
      %p312 = scmp.eq.s32.totalorder %s40, 0
      %p313 = por %p311, %p312
      %s314 = ssub.s32 %s34, %s41
      %p315 = scmp.eq.s32.totalorder %s314, 0
      %s317 = sadd.s32 %s316, 1
      %s318 = scalar_select %p315, %s316, %s317
      %p321 = pneg %p315
      %p322 = scmp.eq.s32.totalorder %s34, 1
      %p323 = por %p321, %p322
      %p324 = scmp.ne.s32.totalorder %s316, %s319
      %p325 = scmp.eq.s32.totalorder %s34, 0
      %p326 = por %p324, %p325
      %p327 = scmp.ne.s32.totalorder %s316, %s319
      %p328 = scmp.eq.s32.totalorder %s39, 1
      %p329 = por %p327, %p328
      %p330 = scmp.ne.s32.totalorder %s319, %s320
      %p331 = scmp.eq.s32.totalorder %s39, 0
      %p332 = por %p330, %p331
      %p333 = scmp.ne.s32.totalorder %s319, %s320
      %p334 = scmp.eq.s32.totalorder %s40, 1
      %p335 = por %p333, %p334
      %p337 = scmp.ne.s32.totalorder %s320, %s336
      %p338 = scmp.eq.s32.totalorder %s40, 0
      %p339 = por %p337, %p338
      %s340 = ssub.s32 %s34, %s41
      %p341 = scmp.eq.s32.totalorder %s340, 0
      %s343 = sadd.s32 %s342, 1
      %s344 = scalar_select %p341, %s342, %s343
      %p347 = pneg %p341
      %p348 = scmp.eq.s32.totalorder %s34, 1
      %p349 = por %p347, %p348
      %p350 = scmp.ne.s32.totalorder %s342, %s345
      %p351 = scmp.eq.s32.totalorder %s34, 0
      %p352 = por %p350, %p351
      %p353 = scmp.ne.s32.totalorder %s342, %s345
      %p354 = scmp.eq.s32.totalorder %s39, 1
      %p355 = por %p353, %p354
      %p356 = scmp.ne.s32.totalorder %s345, %s346
      %p357 = scmp.eq.s32.totalorder %s39, 0
      %p358 = por %p356, %p357
      %p359 = scmp.ne.s32.totalorder %s345, %s346
      %p360 = scmp.eq.s32.totalorder %s40, 1
      %p361 = por %p359, %p360
      %p363 = scmp.ne.s32.totalorder %s346, %s362
      %p364 = scmp.eq.s32.totalorder %s40, 0
      %p365 = por %p363, %p364
      %s366 = ssub.s32 %s34, %s41
      %p367 = scmp.eq.s32.totalorder %s366, 0
      %s369 = sadd.s32 %s368, 1
      %s370 = scalar_select %p367, %s368, %s369
      %p373 = pneg %p367
      %p374 = scmp.eq.s32.totalorder %s34, 1
      %p375 = por %p373, %p374
      %p376 = scmp.ne.s32.totalorder %s368, %s371
      %p377 = scmp.eq.s32.totalorder %s34, 0
      %p378 = por %p376, %p377
      %p379 = scmp.ne.s32.totalorder %s368, %s371
      %p380 = scmp.eq.s32.totalorder %s39, 1
      %p381 = por %p379, %p380
      %p382 = scmp.ne.s32.totalorder %s371, %s372
      %p383 = scmp.eq.s32.totalorder %s39, 0
      %p384 = por %p382, %p383
      %p385 = scmp.ne.s32.totalorder %s371, %s372
      %p386 = scmp.eq.s32.totalorder %s40, 1
      %p387 = por %p385, %p386
      %p389 = scmp.ne.s32.totalorder %s372, %s388
      %p390 = scmp.eq.s32.totalorder %s40, 0
      %p391 = por %p389, %p390
      %p392 = scmp.le.s32.totalorder 1, %s34
      %p393 = scmp.lt.s32.totalorder %s34, 3
      %p394 = pnand %p392, %p393
      %p395 = pneg %p394
      // Predicated region
      $region9: #{tpu_custom_call.1} parent=5 // pred_check
        _
      $region10: #{tpu_custom_call.1} parent=5 // pred_check_branch
        %397 = sbr.rel (%p394) target = $region12
      $region11: #{tpu_custom_call.1} parent=5 // pred_region
        %s398 = ssub.s32 %s34, 1
        // Predicated region
        $region13: #{tpu_custom_call.1} parent=11 // pred_check
          %p399 = pneg %p133
        $region14: #{tpu_custom_call.1} parent=11 // pred_check_branch
          %401 = sbr.rel (%p399) target = $region16
        $region15: #{tpu_custom_call.1} parent=11 // pred_region
          _
        $region16: #{tpu_custom_call.1} parent=11 // pred_fallthru
          _
        // Predicated region
        $region17: #{tpu_custom_call.1} parent=11 // pred_check
          %p402 = pneg %p154
        $region18: #{tpu_custom_call.1} parent=11 // pred_check_branch
          %404 = sbr.rel (%p402) target = $region20
        $region19: #{tpu_custom_call.1} parent=11 // pred_region
          _
        $region20: #{tpu_custom_call.1} parent=11 // pred_fallthru
          _
        // Predicated region
        $region21: #{tpu_custom_call.1} parent=11 // pred_check
          %p405 = pneg %p175
        $region22: #{tpu_custom_call.1} parent=11 // pred_check_branch
          %407 = sbr.rel (%p405) target = $region24
        $region23: #{tpu_custom_call.1} parent=11 // pred_region
          _
        $region24: #{tpu_custom_call.1} parent=11 // pred_fallthru
          _
        // Predicated region
        $region25: #{tpu_custom_call.1} parent=11 // pred_check
          %p408 = pneg %p196
        $region26: #{tpu_custom_call.1} parent=11 // pred_check_branch
          %410 = sbr.rel (%p408) target = $region28
        $region27: #{tpu_custom_call.1} parent=11 // pred_region
          _
        $region28: #{tpu_custom_call.1} parent=11 // pred_fallthru
          _
        // Predicated region
        $region29: #{tpu_custom_call.1} parent=11 // pred_check
          %p411 = pneg %p217
        $region30: #{tpu_custom_call.1} parent=11 // pred_check_branch
          %413 = sbr.rel (%p411) target = $region32
        $region31: #{tpu_custom_call.1} parent=11 // pred_region
          _
        $region32: #{tpu_custom_call.1} parent=11 // pred_fallthru
          _
        // Predicated region
        $region33: #{tpu_custom_call.1} parent=11 // pred_check
          %p414 = pneg %p238
        $region34: #{tpu_custom_call.1} parent=11 // pred_check_branch
          %416 = sbr.rel (%p414) target = $region36
        $region35: #{tpu_custom_call.1} parent=11 // pred_region
          _
        $region36: #{tpu_custom_call.1} parent=11 // pred_fallthru
          _
        // Predicated region
        $region37: #{tpu_custom_call.1} parent=11 // pred_check
          %p417 = pneg %p259
        $region38: #{tpu_custom_call.1} parent=11 // pred_check_branch
          %419 = sbr.rel (%p417) target = $region40
        $region39: #{tpu_custom_call.1} parent=11 // pred_region
          _
        $region40: #{tpu_custom_call.1} parent=11 // pred_fallthru
          _
        // Predicated region
        $region41: #{tpu_custom_call.1} parent=11 // pred_check
          %p420 = pneg %p280
        $region42: #{tpu_custom_call.1} parent=11 // pred_check_branch
          %422 = sbr.rel (%p420) target = $region44
        $region43: #{tpu_custom_call.1} parent=11 // pred_region
          _
        $region44: #{tpu_custom_call.1} parent=11 // pred_fallthru
          _
      $region12: #{tpu_custom_call.1} parent=5 // pred_fallthru
        _
      %p423 = scmp.lt.s32.totalorder %s34, 2
      // Predicated region
      $region45: #{tpu_custom_call.1} parent=5 // pred_check
        %p424 = pneg %p423
      $region46: #{tpu_custom_call.1} parent=5 // pred_check_branch
        %426 = sbr.rel (%p424) target = $region48
      $region47: #{tpu_custom_call.1} parent=5 // pred_region
        // Predicated region
        $region49: #{tpu_custom_call.1} parent=47 // pred_check
          %p427 = pneg %p54
        $region50: #{tpu_custom_call.1} parent=47 // pred_check_branch
          %429 = sbr.rel (%p427) target = $region52
        $region51: #{tpu_custom_call.1} parent=47 // pred_region
          %p430 = scmp.lt.s32.totalorder %s34, 1
          %s431 = scalar_select %p430, %s34, 1
          %s432 = smul.addr %s431, 2
          %s433 = smul.addr %s432, 4
          %s434 = scalar_lea.vmem %s0, %s433
        $region52: #{tpu_custom_call.1} parent=47 // pred_fallthru
          _
        // Predicated region
        $region53: #{tpu_custom_call.1} parent=47 // pred_check
          %p435 = pneg %p80
        $region54: #{tpu_custom_call.1} parent=47 // pred_check_branch
          %437 = sbr.rel (%p435) target = $region56
        $region55: #{tpu_custom_call.1} parent=47 // pred_region
          %p438 = scmp.lt.s32.totalorder %s34, 1
          %s439 = scalar_select %p438, %s34, 1
          %s440 = scalar_lea.vmem %s1, %s439
        $region56: #{tpu_custom_call.1} parent=47 // pred_fallthru
          _
        // Predicated region
        $region57: #{tpu_custom_call.1} parent=47 // pred_check
          %p441 = pneg %p106
        $region58: #{tpu_custom_call.1} parent=47 // pred_check_branch
          %443 = sbr.rel (%p441) target = $region60
        $region59: #{tpu_custom_call.1} parent=47 // pred_region
          %p444 = scmp.lt.s32.totalorder %s34, 1
          %s445 = scalar_select %p444, %s34, 1
          %s446 = smul.addr %s445, 2
          %s447 = smul.addr %s446, 8
          %s448 = scalar_lea.vmem %s2, %s447
        $region60: #{tpu_custom_call.1} parent=47 // pred_fallthru
          _
      $region48: #{tpu_custom_call.1} parent=5 // pred_fallthru
        _
      %p449 = scmp.le.s32.totalorder 1, %s34
      %p450 = scmp.lt.s32.totalorder %s34, 3
      %p451 = pnand %p449, %p450
      %p452 = pneg %p451
      // Predicated region
      $region61: #{tpu_custom_call.1} parent=5 // pred_check
        _
      $region62: #{tpu_custom_call.1} parent=5 // pred_check_branch
        %454 = sbr.rel (%p451) target = $region64
      $region63: #{tpu_custom_call.1} parent=5 // pred_region
        %s455 = ssub.s32 %s34, 1
        %p456 = scmp.lt.s32.totalorder %s39, 1
        %s457 = scalar_select %p456, %s39, 1
        %s458 = smul.addr %s457, 2
        %s459 = smul.addr %s458, 4
        %s460 = scalar_lea.vmem %s0, %s459
        %p461 = pneg %p60
        %p462 = pneg %p57
        %p463 = scmp.lt.s32.totalorder %s39, 1
        %s464 = scalar_select %p463, %s39, 1
        %s465 = scalar_lea.vmem %s1, %s464
        %p466 = pneg %p86
        %p467 = pneg %p83
        %p468 = scmp.lt.s32.totalorder %s39, 1
        %s469 = scalar_select %p468, %s39, 1
        %s470 = smul.addr %s469, 2
        %s471 = smul.addr %s470, 8
        %s472 = scalar_lea.vmem %s2, %s471
        %p473 = pneg %p112
        %p474 = pneg %p109
        %p475 = pneg %p133
        %p476 = pneg %p130
        %p477 = pneg %p154
        %p478 = pneg %p151
        %p479 = pneg %p175
        %p480 = pneg %p172
        %p481 = pneg %p196
        %p482 = pneg %p193
        %p483 = pneg %p217
        %p484 = pneg %p214
        %p485 = pneg %p238
        %p486 = pneg %p235
        %p487 = pneg %p259
        %p488 = pneg %p256
        %p489 = pneg %p280
        %p490 = pneg %p277
        %p491 = pneg %p306
        %p492 = pneg %p303
        %s493 = sand.u32 %s293, 1
        %s494 = scalar_lea.sflag [#allocation5], %s493
        %s495 = sand.u32 %s293, 1
        %s496 = scalar_lea.vmem [#allocation4], %s495
        %p497 = pneg %p332
        %p498 = pneg %p329
        %s499 = sand.u32 %s39, 1
        %s500 = scalar_lea.sflag [#allocation7], %s499
        %s501 = sand.u32 %s319, 1
        %s502 = scalar_lea.vmem [#allocation6], %s501
        %p503 = pneg %p358
        %p504 = pneg %p355
        %s505 = sand.u32 %s39, 1
        %s506 = scalar_lea.sflag [#allocation7], %s505
        %s507 = sand.u32 %s345, 1
        %s508 = scalar_lea.vmem [#allocation8], %s507
        %p509 = pneg %p384
        %p510 = pneg %p381
        %s511 = sand.u32 %s371, 1
        %s512 = scalar_lea.sflag [#allocation10], %s511
        %s513 = sand.u32 %s371, 1
        %s514 = scalar_lea.vmem [#allocation9], %s513
        %p515 = scmp.lt.s32.totalorder %s39, 1
        %s516 = scalar_select %p515, %s39, 1
        %s517 = smul.addr %s516, 2
        %s518 = smul.addr %s517, 4
        %s519 = scalar_lea.vmem %s0, %s518
        %p520 = scmp.lt.s32.totalorder %s39, 1
        %s521 = scalar_select %p520, %s39, 1
        %s522 = scalar_lea.vmem %s1, %s521
        %p523 = scmp.lt.s32.totalorder %s39, 1
        %s524 = scalar_select %p523, %s39, 1
        %s525 = smul.addr %s524, 2
        %s526 = smul.addr %s525, 8
        %s527 = scalar_lea.vmem %s2, %s526
        %v529 = vld [vmem:[%s519] sm:$0xf]
        %v530 = vld [vmem:[%s519 + $0x4] sm:$0xf]
        %v531 = vld [vmem:[%s522] sm:$0x1]
        %v532 = vsub.f32 1.0, %v531
        %v533 = vmul.f32 %v532, 1e+30
        %v534 = vld [vmem:[%s527] sm:$0xff]
        %v535 = vld [vmem:[%s527 + $0x8] sm:$0xff]
        %v536 = vsub.f32 1.0, %v534
        %v537 = vsub.f32 1.0, %v535
        %v538 = vmul.f32 %v536, 1e+30
        %v539 = vmul.f32 %v537, 1e+30
        %v540 = vld [vmem:[%s3] sm:$0xf]
        %v541 = vld [vmem:[%s3 + $0x4] sm:$0xf]
        %v542 = vld [vmem:[%s3 + $0x8] sm:$0xf]
        %v543 = vld [vmem:[%s3 + $0xc] sm:$0xf]
        %v544 = vld [vmem:[%s4] sm:$0x1]
        %v546 = vlaneseq
        %v547 = vshrl.u32 %v546, 7
        %v548 = vsub.s32 0, %v547
        %v549 = vrot.slane %v544, %v548
        %v553 = vunpack.c.l.b16 %v529
        %v554 = vunpack.c.l.b16 %v530
        %v555 = vpack.c.b16 %v554, %v553
        %v560 = vunpack.c.l.b16 %v540
        %v561 = vunpack.c.l.b16 %v541
        %v562 = vunpack.c.l.b16 %v542
        %v563 = vunpack.c.l.b16 %v543
        %v564 = vpack.c.b16 %v561, %v560
        %v565 = vpack.c.b16 %v563, %v562
        %vm568 = vcmask 261120
        %v570 = vsel %vm568, %v555, 0
        %572 = vmatprep.subr.bf16.mxu0 0
        %573 = vmatpush1.bf16.msra.mxu0 %v564
        %574 = vmatprep.subr.bf16.mxu0 0
        %575 = vmatpush1.bf16.msra.mxu0 %v565
        %576 = vmatprep.subr.bf16.mxu0 0
        %577 = vmatpush1.bf16.msra.mxu0 0
        %578 = vmatprep.subr.bf16.mxu0 0
        %579 = vmatpush1.bf16.msra.mxu0 0
        %580 = vmatprep.subr.bf16.mxu0 0
        %581 = vmatpush1.bf16.msra.mxu0 0
        %582 = vmatprep.subr.bf16.mxu0 0
        %583 = vmatpush1.bf16.msra.mxu0 0
        %584 = vmatprep.subr.bf16.mxu0 0
        %585 = vmatpush1.bf16.msra.mxu0 0
        %586 = vmatprep.subr.bf16.mxu0 0
        %587 = vmatpush1.bf16.msra.mxu0 0
        %588 = vmatprep.subr.bf16.mxu0 0
        %589 = vmatpush1.bf16.msra.mxu0 0
        %590 = vmatprep.subr.bf16.mxu0 0
        %591 = vmatpush1.bf16.msra.mxu0 0
        %592 = vmatprep.subr.bf16.mxu0 0
        %593 = vmatpush1.bf16.msra.mxu0 0
        %594 = vmatprep.subr.bf16.mxu0 0
        %595 = vmatpush1.bf16.msra.mxu0 0
        %596 = vmatprep.subr.bf16.mxu0 0
        %597 = vmatpush1.bf16.msra.mxu0 0
        %598 = vmatprep.subr.bf16.mxu0 0
        %599 = vmatpush1.bf16.msra.mxu0 0
        %600 = vmatprep.subr.bf16.mxu0 0
        %601 = vmatpush1.bf16.msra.mxu0 0
        %602 = vmatprep.subr.bf16.mxu0 0
        %603 = vmatpush1.bf16.msra.mxu0 0
        %604 = vmatprep.mubr.bf16.mxu0 0
        %605 = vmatmul.mubr.bf16.gmra.mrb[0].mxu0 %v570
        %v606 = vpop.f32.mrb[0].mxu0
        %v607 = vadd.f32 %v549, %v606
        %v608 = vpop.f32.mrb[0].mxu0
        %v609 = vpop.f32.mrb[0].mxu0
        %v610 = vadd.f32 %v549, %v609
        %v611 = vpop.f32.mrb[0].mxu0
        %612 = vdwg.mxu0
        %v613 = vmax.f32 %v607, 0.0
        %v614 = vmax.f32 %v610, 0.0
        %v615 = vld [vmem:[%s5] sm:$0x1]
        %v616 = vld [vmem:[%s6] sm:$0x1]
        %vm617 = vcmask 523264
        %v618 = vsel %vm617, %v613, 0.0
        %619 = vadd.xlane.f32.xlu0 %v618
        %v620 = vpop.xlane.xlu0 %619
        %v621 = vsel %vm617, %v614, 0.0
        %622 = vadd.xlane.f32.xlu0 %v621
        %v623 = vpop.xlane.xlu0 %622
        %v624 = vrcp.pop 64.0
        %v625 = vmul.f32 %v620, %v624
        %v626 = vmul.f32 %v623, %v624
        %v627 = vmul.f32 %v613, %v613
        %v628 = vmul.f32 %v614, %v614
        %v629 = vsel %vm617, %v627, 0.0
        %630 = vadd.xlane.f32.xlu0 %v629
        %v631 = vpop.xlane.xlu0 %630
        %v632 = vsel %vm617, %v628, 0.0
        %633 = vadd.xlane.f32.xlu0 %v632
        %v634 = vpop.xlane.xlu0 %633
        %v635 = vmul.f32 %v631, %v624
        %v636 = vmul.f32 %v634, %v624
        %v637 = vmul.f32 %v625, %v625
        %v638 = vmul.f32 %v626, %v626
        %v639 = vsub.f32 %v635, %v637
        %v640 = vsub.f32 %v636, %v638
        %v641 = vmax.f32 %v639, 0.0
        %v642 = vmax.f32 %v640, 0.0
        %v643 = vsub.f32 %v613, %v625
        %v644 = vsub.f32 %v614, %v626
        %v645 = vadd.f32 %v641, 1e-12
        %v646 = vadd.f32 %v642, 1e-12
        %v647 = vrsqrt.pop %v645
        %v648 = vrsqrt.pop %v646
        %v649 = vmul.f32 %v643, %v647
        %v650 = vmul.f32 %v644, %v648
        %v652 = vlaneseq
        %v653 = vshrl.u32 %v652, 7
        %v654 = vsub.s32 0, %v653
        %v655 = vrot.slane %v615, %v654
        %v657 = vmul.f32 %v655, %v649
        %v658 = vmul.f32 %v655, %v650
        %v660 = vlaneseq
        %v661 = vshrl.u32 %v660, 7
        %v662 = vsub.s32 0, %v661
        %v663 = vrot.slane %v616, %v662
        %v665 = vadd.f32 %v657, %v663
        %v666 = vadd.f32 %v658, %v663
        %669 = vrot.lane.b32.xlu0 %v613, 64
        %v670 = vpop.permute.xlu0 %669
        %671 = vrot.lane.b32.xlu0 %v614, 64
        %v672 = vpop.permute.xlu0 %671
        %v675 = vsel %vm617, %v670, 0.0
        %676 = vadd.xlane.f32.xlu0 %v675
        %v677 = vpop.xlane.xlu0 %676
        %v678 = vsel %vm617, %v672, 0.0
        %679 = vadd.xlane.f32.xlu0 %v678
        %v680 = vpop.xlane.xlu0 %679
        %v681 = vmul.f32 %v677, %v624
        %v682 = vmul.f32 %v680, %v624
        %685 = vrot.lane.b32.xlu0 %v627, 64
        %v686 = vpop.permute.xlu0 %685
        %687 = vrot.lane.b32.xlu0 %v628, 64
        %v688 = vpop.permute.xlu0 %687
        %v691 = vsel %vm617, %v686, 0.0
        %692 = vadd.xlane.f32.xlu0 %v691
        %v693 = vpop.xlane.xlu0 %692
        %v694 = vsel %vm617, %v688, 0.0
        %695 = vadd.xlane.f32.xlu0 %v694
        %v696 = vpop.xlane.xlu0 %695
        %v697 = vmul.f32 %v693, %v624
        %v698 = vmul.f32 %v696, %v624
        %v699 = vmul.f32 %v681, %v681
        %v700 = vmul.f32 %v682, %v682
        %v701 = vsub.f32 %v697, %v699
        %v702 = vsub.f32 %v698, %v700
        %v703 = vmax.f32 %v701, 0.0
        %v704 = vmax.f32 %v702, 0.0
        %v705 = vsub.f32 %v613, %v681
        %v706 = vsub.f32 %v614, %v682
        %v707 = vadd.f32 %v703, 1e-12
        %v708 = vadd.f32 %v704, 1e-12
        %v709 = vrsqrt.pop %v707
        %v710 = vrsqrt.pop %v708
        %v711 = vmul.f32 %v705, %v709
        %v712 = vmul.f32 %v706, %v710
        %v713 = vmul.f32 %v655, %v711
        %v714 = vmul.f32 %v655, %v712
        %v715 = vadd.f32 %v713, %v663
        %v716 = vadd.f32 %v714, %v663
        %v717 = vld [vmem:[%s7] sm:$0x1]
        %v718 = vld [vmem:[%s9] sm:$0x1]
        %v719 = vld [vmem:[#allocation2] sm:$0x1]
        %721 = vset.pattern.permute.xlu0 0
        %722 = vperm.xlu0 %721, %v719
        %v723 = vpop.permute.xlu0 %722
        %v725 = vlaneseq
        %v726 = vshrl.u32 %v725, 7
        %v727 = vsub.s32 0, %v726
        %v728 = vrot.slane %v723, %v727
        %v730 = vsel %vm617, %v717, 0
        %v733 = vsel %vm617, %v665, 0
        %v736 = vsel %vm617, %v666, 0
        %738 = vmatprep.subr.mxu0 0.0
        %739 = vmatpush1.xpose.msra.mxu0 %v733
        %740 = vmatprep.subr.mxu0 0.0
        %741 = vmatpush1.xpose.msra.mxu0 %v736
        %742 = vmatprep.subr.mxu0 0.0
        %743 = vmatpush1.xpose.msra.mxu0 0.0
        %744 = vmatprep.subr.mxu0 0.0
        %745 = vmatpush1.xpose.msra.mxu0 0.0
        %746 = vmatprep.subr.mxu0 0.0
        %747 = vmatpush1.xpose.msra.mxu0 0.0
        %748 = vmatprep.subr.mxu0 0.0
        %749 = vmatpush1.xpose.msra.mxu0 0.0
        %750 = vmatprep.subr.mxu0 0.0
        %751 = vmatpush1.xpose.msra.mxu0 0.0
        %752 = vmatprep.subr.mxu0 0.0
        %753 = vmatpush1.xpose.msra.mxu0 0.0
        %754 = vmatprep.subr.mxu0 0.0
        %755 = vmatpush1.xpose.msra.mxu0 0.0
        %756 = vmatprep.subr.mxu0 0.0
        %757 = vmatpush1.xpose.msra.mxu0 0.0
        %758 = vmatprep.subr.mxu0 0.0
        %759 = vmatpush1.xpose.msra.mxu0 0.0
        %760 = vmatprep.subr.mxu0 0.0
        %761 = vmatpush1.xpose.msra.mxu0 0.0
        %762 = vmatprep.subr.mxu0 0.0
        %763 = vmatpush1.xpose.msra.mxu0 0.0
        %764 = vmatprep.subr.mxu0 0.0
        %765 = vmatpush1.xpose.msra.mxu0 0.0
        %766 = vmatprep.subr.mxu0 0.0
        %767 = vmatpush1.xpose.msra.mxu0 0.0
        %768 = vmatprep.subr.mxu0 0.0
        %769 = vmatpush1.xpose.msra.mxu0 0.0
        %770 = vmatprep.subr.mxu0 0.0
        %771 = vmatpush1.xpose.msra.mxu0 0.0
        %772 = vmatprep.subr.mxu0 0.0
        %773 = vmatpush1.xpose.msra.mxu0 0.0
        %774 = vmatprep.subr.mxu0 0.0
        %775 = vmatpush1.xpose.msra.mxu0 0.0
        %776 = vmatprep.subr.mxu0 0.0
        %777 = vmatpush1.xpose.msra.mxu0 0.0
        %778 = vmatprep.subr.mxu0 0.0
        %779 = vmatpush1.xpose.msra.mxu0 0.0
        %780 = vmatprep.subr.mxu0 0.0
        %781 = vmatpush1.xpose.msra.mxu0 0.0
        %782 = vmatprep.subr.mxu0 0.0
        %783 = vmatpush1.xpose.msra.mxu0 0.0
        %784 = vmatprep.subr.mxu0 0.0
        %785 = vmatpush1.xpose.msra.mxu0 0.0
        %786 = vmatprep.subr.mxu0 0.0
        %787 = vmatpush1.xpose.msra.mxu0 0.0
        %788 = vmatprep.subr.mxu0 0.0
        %789 = vmatpush1.xpose.msra.mxu0 0.0
        %790 = vmatprep.subr.mxu0 0.0
        %791 = vmatpush1.xpose.msra.mxu0 0.0
        %792 = vmatprep.subr.mxu0 0.0
        %793 = vmatpush1.xpose.msra.mxu0 0.0
        %794 = vmatprep.subr.mxu0 0.0
        %795 = vmatpush1.xpose.msra.mxu0 0.0
        %796 = vmatprep.subr.mxu0 0.0
        %797 = vmatpush1.xpose.msra.mxu0 0.0
        %798 = vmatprep.subr.mxu0 0.0
        %799 = vmatpush1.xpose.msra.mxu0 0.0
        %800 = vmatprep.subr.mxu0 0.0
        %801 = vmatpush1.xpose.msra.mxu0 0.0
        %802 = vmatprep.mubr.f32.mxu0 0.0
        %803 = vmatmul.mubr.f32.gmra.mrb[0].mxu0 %v730
        %v804 = vpop.f32.mrb[0].mxu0
        %v805 = vadd.f32 %v728, %v804
        %v806 = vpop.f32.mrb[0].mxu0
        %807 = vdwg.mxu0
        %v808 = vld [vmem:[#allocation3] sm:$0x1]
        %810 = vset.pattern.permute.xlu0 0
        %811 = vperm.xlu0 %810, %v808
        %v812 = vpop.permute.xlu0 %811
        %v814 = vlaneseq
        %v815 = vshrl.u32 %v814, 7
        %v816 = vsub.s32 0, %v815
        %v817 = vrot.slane %v812, %v816
        %820 = vrot.lane.b32.xlu0 %v715, 64
        %v821 = vpop.permute.xlu0 %820
        %822 = vrot.lane.b32.xlu0 %v716, 64
        %v823 = vpop.permute.xlu0 %822
        %v825 = vsel %vm617, %v718, 0
        %v827 = vsel %vm617, %v821, 0
        %v829 = vsel %vm617, %v823, 0
        %831 = vmatprep.subr.mxu0 0.0
        %832 = vmatpush1.xpose.msra.mxu0 %v827
        %833 = vmatprep.subr.mxu0 0.0
        %834 = vmatpush1.xpose.msra.mxu0 %v829
        %835 = vmatprep.subr.mxu0 0.0
        %836 = vmatpush1.xpose.msra.mxu0 0.0
        %837 = vmatprep.subr.mxu0 0.0
        %838 = vmatpush1.xpose.msra.mxu0 0.0
        %839 = vmatprep.subr.mxu0 0.0
        %840 = vmatpush1.xpose.msra.mxu0 0.0
        %841 = vmatprep.subr.mxu0 0.0
        %842 = vmatpush1.xpose.msra.mxu0 0.0
        %843 = vmatprep.subr.mxu0 0.0
        %844 = vmatpush1.xpose.msra.mxu0 0.0
        %845 = vmatprep.subr.mxu0 0.0
        %846 = vmatpush1.xpose.msra.mxu0 0.0
        %847 = vmatprep.subr.mxu0 0.0
        %848 = vmatpush1.xpose.msra.mxu0 0.0
        %849 = vmatprep.subr.mxu0 0.0
        %850 = vmatpush1.xpose.msra.mxu0 0.0
        %851 = vmatprep.subr.mxu0 0.0
        %852 = vmatpush1.xpose.msra.mxu0 0.0
        %853 = vmatprep.subr.mxu0 0.0
        %854 = vmatpush1.xpose.msra.mxu0 0.0
        %855 = vmatprep.subr.mxu0 0.0
        %856 = vmatpush1.xpose.msra.mxu0 0.0
        %857 = vmatprep.subr.mxu0 0.0
        %858 = vmatpush1.xpose.msra.mxu0 0.0
        %859 = vmatprep.subr.mxu0 0.0
        %860 = vmatpush1.xpose.msra.mxu0 0.0
        %861 = vmatprep.subr.mxu0 0.0
        %862 = vmatpush1.xpose.msra.mxu0 0.0
        %863 = vmatprep.subr.mxu0 0.0
        %864 = vmatpush1.xpose.msra.mxu0 0.0
        %865 = vmatprep.subr.mxu0 0.0
        %866 = vmatpush1.xpose.msra.mxu0 0.0
        %867 = vmatprep.subr.mxu0 0.0
        %868 = vmatpush1.xpose.msra.mxu0 0.0
        %869 = vmatprep.subr.mxu0 0.0
        %870 = vmatpush1.xpose.msra.mxu0 0.0
        %871 = vmatprep.subr.mxu0 0.0
        %872 = vmatpush1.xpose.msra.mxu0 0.0
        %873 = vmatprep.subr.mxu0 0.0
        %874 = vmatpush1.xpose.msra.mxu0 0.0
        %875 = vmatprep.subr.mxu0 0.0
        %876 = vmatpush1.xpose.msra.mxu0 0.0
        %877 = vmatprep.subr.mxu0 0.0
        %878 = vmatpush1.xpose.msra.mxu0 0.0
        %879 = vmatprep.subr.mxu0 0.0
        %880 = vmatpush1.xpose.msra.mxu0 0.0
        %881 = vmatprep.subr.mxu0 0.0
        %882 = vmatpush1.xpose.msra.mxu0 0.0
        %883 = vmatprep.subr.mxu0 0.0
        %884 = vmatpush1.xpose.msra.mxu0 0.0
        %885 = vmatprep.subr.mxu0 0.0
        %886 = vmatpush1.xpose.msra.mxu0 0.0
        %887 = vmatprep.subr.mxu0 0.0
        %888 = vmatpush1.xpose.msra.mxu0 0.0
        %889 = vmatprep.subr.mxu0 0.0
        %890 = vmatpush1.xpose.msra.mxu0 0.0
        %891 = vmatprep.subr.mxu0 0.0
        %892 = vmatpush1.xpose.msra.mxu0 0.0
        %893 = vmatprep.subr.mxu0 0.0
        %894 = vmatpush1.xpose.msra.mxu0 0.0
        %895 = vmatprep.mubr.f32.mxu0 0.0
        %896 = vmatmul.mubr.f32.gmra.mrb[0].mxu0 %v825
        %v897 = vpop.f32.mrb[0].mxu0
        %v898 = vadd.f32 %v817, %v897
        %v899 = vpop.f32.mrb[0].mxu0
        %900 = vdwg.mxu0
        %v901 = vlaneseq
        %v902 = vshrl.u32 %v901, 7
        %v903 = vsub.s32 0, %v902
        %v904 = vrot.slane %v717, %v903
        %v906 = vmul.f32 %v665, %v904
        %v907 = vmul.f32 %v666, %v904
        %v908 = vsel %vm617, %v906, 0.0
        %909 = vadd.xlane.f32.xlu0 %v908
        %v910 = vpop.xlane.xlu0 %909
        %v911 = vsel %vm617, %v907, 0.0
        %912 = vadd.xlane.f32.xlu0 %v911
        %v913 = vpop.xlane.xlu0 %912
        %v914 = vld [vmem:[#allocation2] sm:$0x1]
        %v916 = vlaneseq
        %v917 = vshrl.u32 %v916, 7
        %v918 = vsub.s32 0, %v917
        %v919 = vrot.slane %v914, %v918
        %v921 = vadd.f32 %v910, %v919
        %v922 = vadd.f32 %v913, %v919
        %v923 = vlaneseq
        %v924 = vshrl.u32 %v923, 7
        %v925 = vsub.s32 0, %v924
        %v926 = vrot.slane %v718, %v925
        %927 = vrot.lane.b32.xlu0 %v926, 64
        %v928 = vpop.permute.xlu0 %927
        %v930 = vmul.f32 %v715, %v928
        %v931 = vmul.f32 %v716, %v928
        %934 = vrot.lane.b32.xlu0 %v930, 64
        %v935 = vpop.permute.xlu0 %934
        %936 = vrot.lane.b32.xlu0 %v931, 64
        %v937 = vpop.permute.xlu0 %936
        %v940 = vsel %vm617, %v935, 0.0
        %941 = vadd.xlane.f32.xlu0 %v940
        %v942 = vpop.xlane.xlu0 %941
        %v943 = vsel %vm617, %v937, 0.0
        %944 = vadd.xlane.f32.xlu0 %v943
        %v945 = vpop.xlane.xlu0 %944
        %v946 = vlaneseq
        %v947 = vshrl.u32 %v946, 7
        %v948 = vsub.s32 0, %v947
        %v949 = vrot.slane %v808, %v948
        %v951 = vadd.f32 %v942, %v949
        %v952 = vadd.f32 %v945, %v949
        %v953 = vsub.f32 %v805, %v533
        %v954 = vsub.f32 %v898, %v533
        %v955 = vsub.f32 %v921, %v538
        %v956 = vsub.f32 %v922, %v539
        %v957 = vsub.f32 %v951, %v538
        %v958 = vsub.f32 %v952, %v539
        %vm959 = vcmask 122880
        %960 = vst.msk [vmem:[%s496] sm:$0x1] %vm959, %v953
        %961 = vst.msk [vmem:[%s502] sm:$0x1] %vm959, %v954
        %v962 = vlaneseq
        %v963 = vshrl.u32 %v962, 7
        %v964 = vadd.s32 %v963, 8
        %v965 = vlaneseq
        %v966 = vand.u32 %v965, 127
        %968 = vset.pattern.permute.xlu0 0
        %969 = vperm.xlu0 %968, %v957
        %v970 = vpop.permute.xlu0 %969
        %973 = vset.pattern.permute.xlu0 0
        %974 = vperm.xlu0 %973, %v958
        %v975 = vpop.permute.xlu0 %974
        %v977 = vlaneseq
        %v978 = vshrl.u32 %v977, 7
        %v979 = vsub.s32 0, %v978
        %v980 = vrot.slane %v953, %v979
        %v981 = vadd.f32 %v970, %v980
        %v982 = vadd.f32 %v975, %v980
        %vm983 = vcmp.ge.s32.totalorder %v963, %v966
        %vm984 = vcmp.ge.s32.totalorder %v964, %v966
        %v985 = vsub.s32 %v963, %v966
        %v986 = vsub.s32 %v964, %v966
        %vm987 = vcmp.le.s32.totalorder %v985, 15
        %vm988 = vcmp.le.s32.totalorder %v986, 15
        %vm989 = vmand %vm983, %vm987
        %vm990 = vmand %vm984, %vm988
        %v991 = vsel %vm989, 0.0, -1e+30
        %v992 = vsel %vm990, 0.0, -1e+30
        %v993 = vadd.f32 %v981, %v991
        %v994 = vadd.f32 %v982, %v992
        %996 = vset.pattern.permute.xlu0 0
        %997 = vperm.xlu0 %996, %v955
        %v998 = vpop.permute.xlu0 %997
        %1001 = vset.pattern.permute.xlu0 0
        %1002 = vperm.xlu0 %1001, %v956
        %v1003 = vpop.permute.xlu0 %1002
        %v1005 = vlaneseq
        %v1006 = vshrl.u32 %v1005, 7
        %v1007 = vsub.s32 0, %v1006
        %v1008 = vrot.slane %v954, %v1007
        %v1009 = vadd.f32 %v998, %v1008
        %v1010 = vadd.f32 %v1003, %v1008
        %vm1011 = vcmp.ge.s32.totalorder %v966, %v963
        %vm1012 = vcmp.ge.s32.totalorder %v966, %v964
        %v1013 = vsub.s32 %v966, %v963
        %v1014 = vsub.s32 %v966, %v964
        %vm1015 = vcmp.le.s32.totalorder %v1013, 15
        %vm1016 = vcmp.le.s32.totalorder %v1014, 15
        %vm1017 = vmand %vm1011, %vm1015
        %vm1018 = vmand %vm1012, %vm1016
        %v1019 = vsel %vm1017, 0.0, -1e+30
        %v1020 = vsel %vm1018, 0.0, -1e+30
        %v1021 = vadd.f32 %v1009, %v1019
        %v1022 = vadd.f32 %v1010, %v1020
        %vm1023 = vcmask 130048
        %v1024 = vsel %vm1023, %v993, -inf
        %v1025 = vsel %vm1023, %v994, -inf
        %v1026 = vmax.f32 %v1024, %v1025
        %v1027 = vrot.slane %v1026, 4
        %v1028 = vmax.f32 %v1026, %v1027
        %v1029 = vrot.slane %v1028, 2
        %v1030 = vmax.f32 %v1028, %v1029
        %v1031 = vrot.slane %v1030, 1
        %v1032 = vmax.f32 %v1030, %v1031
        %1033 = vst.msk [vmem:[%s508] sm:$0x1] %vm959, %v1032
        %v1034 = vsel %vm1023, %v1021, -inf
        %v1035 = vsel %vm1023, %v1022, -inf
        %v1036 = vmax.f32 %v1034, %v1035
        %v1037 = vrot.slane %v1036, 4
        %v1038 = vmax.f32 %v1036, %v1037
        %v1039 = vrot.slane %v1038, 2
        %v1040 = vmax.f32 %v1038, %v1039
        %v1041 = vrot.slane %v1040, 1
        %v1042 = vmax.f32 %v1040, %v1041
        %1043 = vst.msk [vmem:[%s514] sm:$0x1] %vm959, %v1042
        %s1044 = sand.u32 %s293, 1
        %s1045 = scalar_lea.sflag [#allocation5], %s1044
        %s1046 = sand.u32 %s293, 1
        %s1047 = scalar_lea.vmem [#allocation4], %s1046
        %s1048 = sand.u32 %s39, 1
        %s1049 = scalar_lea.sflag [#allocation7], %s1048
        %s1050 = sand.u32 %s319, 1
        %s1051 = scalar_lea.vmem [#allocation6], %s1050
        %s1052 = sand.u32 %s39, 1
        %s1053 = scalar_lea.sflag [#allocation7], %s1052
        %s1054 = sand.u32 %s345, 1
        %s1055 = scalar_lea.vmem [#allocation8], %s1054
        %s1056 = sand.u32 %s371, 1
        %s1057 = scalar_lea.sflag [#allocation10], %s1056
        %s1058 = sand.u32 %s371, 1
        %s1059 = scalar_lea.vmem [#allocation9], %s1058
        // Predicated region
        $region65: #{tpu_custom_call.1} parent=63 // pred_check
          %p1060 = pneg %p303
        $region66: #{tpu_custom_call.1} parent=63 // pred_check_branch
          %1062 = sbr.rel (%p1060) target = $region68
        $region67: #{tpu_custom_call.1} parent=63 // pred_region
          %s1064 = ssub.s32 16, 16
          %1065 = vsyncadd %s1045, %s1064
          %s1066 = smul.addr %s39, 16
          %s1067 = scalar_lea.hbm %s11, %s1066
          %s1069 = sshll.u32 %s1047, 4
          %s1070 = int_to_ptr.vmem [resolvable:$true] %s1069
          %1072 = dma.vmem_to_hbm [thread:$0]  %s1070, 16, %s1067, %s1045
        $region68: #{tpu_custom_call.1} parent=63 // pred_fallthru
          _
        // Predicated region
        $region69: #{tpu_custom_call.1} parent=63 // pred_check
          %p1073 = pneg %p329
        $region70: #{tpu_custom_call.1} parent=63 // pred_check_branch
          %1075 = sbr.rel (%p1073) target = $region72
        $region71: #{tpu_custom_call.1} parent=63 // pred_region
          %s1077 = ssub.s32 16, 16
          %1078 = vsyncadd %s1049, %s1077
          %s1079 = smul.addr %s39, 16
          %s1080 = scalar_lea.hbm %s12, %s1079
          %s1082 = sshll.u32 %s1051, 4
          %s1083 = int_to_ptr.vmem [resolvable:$true] %s1082
          %1085 = dma.vmem_to_hbm [thread:$0]  %s1083, 16, %s1080, %s1049
        $region72: #{tpu_custom_call.1} parent=63 // pred_fallthru
          _
        // Predicated region
        $region73: #{tpu_custom_call.1} parent=63 // pred_check
          %p1086 = pneg %p355
        $region74: #{tpu_custom_call.1} parent=63 // pred_check_branch
          %1088 = sbr.rel (%p1086) target = $region76
        $region75: #{tpu_custom_call.1} parent=63 // pred_region
          %s1090 = ssub.s32 16, 16
          %1091 = vsyncadd %s1053, %s1090
          %s1092 = smul.addr %s39, 16
          %s1093 = scalar_lea.hbm %s13, %s1092
          %s1095 = sshll.u32 %s1055, 4
          %s1096 = int_to_ptr.vmem [resolvable:$true] %s1095
          %1098 = dma.vmem_to_hbm [thread:$0]  %s1096, 16, %s1093, %s1053
        $region76: #{tpu_custom_call.1} parent=63 // pred_fallthru
          _
        // Predicated region
        $region77: #{tpu_custom_call.1} parent=63 // pred_check
          %p1099 = pneg %p381
        $region78: #{tpu_custom_call.1} parent=63 // pred_check_branch
          %1101 = sbr.rel (%p1099) target = $region80
        $region79: #{tpu_custom_call.1} parent=63 // pred_region
          %s1103 = ssub.s32 16, 16
          %1104 = vsyncadd %s1057, %s1103
          %s1105 = smul.addr %s39, 16
          %s1106 = scalar_lea.hbm %s14, %s1105
          %s1108 = sshll.u32 %s1059, 4
          %s1109 = int_to_ptr.vmem [resolvable:$true] %s1108
          %1111 = dma.vmem_to_hbm [thread:$0]  %s1109, 16, %s1106, %s1057
        $region80: #{tpu_custom_call.1} parent=63 // pred_fallthru
          _
      $region64: #{tpu_custom_call.1} parent=5 // pred_fallthru
        _
      %p1112 = scmp.le.s32.totalorder 2, %s34
      // Predicated region
      $region81: #{tpu_custom_call.1} parent=5 // pred_check
        %p1113 = pneg %p1112
      $region82: #{tpu_custom_call.1} parent=5 // pred_check_branch
        %1115 = sbr.rel (%p1113) target = $region84
      $region83: #{tpu_custom_call.1} parent=5 // pred_region
        %s1116 = ssub.s32 %s34, 2
        // Predicated region
        $region85: #{tpu_custom_call.1} parent=83 // pred_check
          %p1117 = pneg %p309
        $region86: #{tpu_custom_call.1} parent=83 // pred_check_branch
          %1119 = sbr.rel (%p1117) target = $region88
        $region87: #{tpu_custom_call.1} parent=83 // pred_region
          %s1120 = sand.u32 %s294, 1
          %s1121 = scalar_lea.sflag [#allocation5], %s1120
          %s1122 = sand.u32 %s294, 1
          %s1123 = scalar_lea.vmem [#allocation4], %s1122
          %1124 = dma.done %s1121, 16
        $region88: #{tpu_custom_call.1} parent=83 // pred_fallthru
          _
        // Predicated region
        $region89: #{tpu_custom_call.1} parent=83 // pred_check
          %p1125 = pneg %p335
        $region90: #{tpu_custom_call.1} parent=83 // pred_check_branch
          %1127 = sbr.rel (%p1125) target = $region92
        $region91: #{tpu_custom_call.1} parent=83 // pred_region
          %s1128 = sand.u32 %s40, 1
          %s1129 = scalar_lea.sflag [#allocation7], %s1128
          %s1130 = sand.u32 %s320, 1
          %s1131 = scalar_lea.vmem [#allocation6], %s1130
          %1132 = dma.done %s1129, 16
        $region92: #{tpu_custom_call.1} parent=83 // pred_fallthru
          _
        // Predicated region
        $region93: #{tpu_custom_call.1} parent=83 // pred_check
          %p1133 = pneg %p361
        $region94: #{tpu_custom_call.1} parent=83 // pred_check_branch
          %1135 = sbr.rel (%p1133) target = $region96
        $region95: #{tpu_custom_call.1} parent=83 // pred_region
          %s1136 = sand.u32 %s40, 1
          %s1137 = scalar_lea.sflag [#allocation7], %s1136
          %s1138 = sand.u32 %s346, 1
          %s1139 = scalar_lea.vmem [#allocation8], %s1138
          %1140 = dma.done %s1137, 16
        $region96: #{tpu_custom_call.1} parent=83 // pred_fallthru
          _
        // Predicated region
        $region97: #{tpu_custom_call.1} parent=83 // pred_check
          %p1141 = pneg %p387
        $region98: #{tpu_custom_call.1} parent=83 // pred_check_branch
          %1143 = sbr.rel (%p1141) target = $region100
        $region99: #{tpu_custom_call.1} parent=83 // pred_region
          %s1144 = sand.u32 %s372, 1
          %s1145 = scalar_lea.sflag [#allocation10], %s1144
          %s1146 = sand.u32 %s372, 1
          %s1147 = scalar_lea.vmem [#allocation9], %s1146
          %1148 = dma.done %s1145, 16
        $region100: #{tpu_custom_call.1} parent=83 // pred_fallthru
          _
      $region84: #{tpu_custom_call.1} parent=5 // pred_fallthru
        _
    $region6: #{tpu_custom_call.1} parent=1 // loop_footer
      %s38 = sadd.s32 1, %s34
    $region7: #{tpu_custom_call.1} parent=1 // loop_footer_branch
      %33 = sbr.rel target = $region3
    $region8: #{tpu_custom_call.1} parent=1 // loop_exit
      _
    %1149 = vsyncpa [#allocation5], 1
    %s1150 = scalar_lea.sflag [#allocation5], 1
    %1151 = vsyncpa %s1150, 1
    %1152 = vsyncpa [#allocation7], 1
    %s1153 = scalar_lea.sflag [#allocation7], 1
    %1154 = vsyncpa %s1153, 1
    %1155 = vsyncpa [#allocation10], 1
    %s1156 = scalar_lea.sflag [#allocation10], 1
    %1157 = vsyncpa %s1156, 1

</llo_original>
